<compile_context>
chip_gen: v7x
topology: tpu7x:2x2x1
jax: 0.10.0
libtpu: 0.0.40
codegen_flags: <defaults>
</compile_context>

<pallas_src>
import math

import jax
import jax.numpy as jnp
from jax.experimental import pallas as pl
from jax.experimental.pallas import tpu as pltpu


LANE = 128
SUBLANE = 8


def _round_up(x, m):
    return ((x + m - 1) // m) * m


def _leaky_relu(x, slope=0.01):
    return jnp.where(x > 0, x, slope * x)


def _softplus(x):
    # numerically stable softplus: max(x,0) + log1p(exp(-|x|))
    return jnp.maximum(x, 0.0) + jnp.log1p(jnp.exp(-jnp.abs(x)))


def _sigmoid(x):
    # exp + approx reciprocal both ride the EUP slot (keeps divide off the VALU)
    return pl.reciprocal(1.0 + jnp.exp(-x), approx=True)


def dualnet_kernel(p_ref, q_ref,
                   w0p, w0q, b0,
                   w1, b1, w2, b2, w3, b3, w4, b4,
                   wsp1, bsp1, wsig, bsig, wsp2, bsp2,
                   out_sp1, out_sig, out_sp2):
    """One batch tile of the DualNet forward.

    p_ref/q_ref : (TILE_B, N*N) f32          flattened p / q rows
    w*          : bf16, lane-padded          pre-transposed Linear weights
    b*          : (1, padded_cols) f32       biases
    out_*       : (TILE_B, padded_cols) f32  activated head outputs (3 groups)
    """
    pb = p_ref[...].astype(jnp.bfloat16)
    qb = q_ref[...].astype(jnp.bfloat16)

    # layer 0 with the stack-interleave folded in: a @ w0 == p @ w0_even + q @ w0_odd
    h = (jnp.dot(pb, w0p[...], preferred_element_type=jnp.float32)
         + jnp.dot(qb, w0q[...], preferred_element_type=jnp.float32)
         + b0[...])
    h = _leaky_relu(h)

    # remaining 4 x (Linear -> LeakyReLU)
    for w_ref, b_ref in ((w1, b1), (w2, b2), (w3, b3), (w4, b4)):
        h = jnp.dot(h.astype(jnp.bfloat16), w_ref[...],
                    preferred_element_type=jnp.float32) + b_ref[...]
        h = _leaky_relu(h)

    hb = h.astype(jnp.bfloat16)

    # output head split into 3 lane-padded column groups: one activation per group
    out_sp1[...] = _softplus(
        jnp.dot(hb, wsp1[...], preferred_element_type=jnp.float32) + bsp1[...])
    out_sig[...] = _sigmoid(
        jnp.dot(hb, wsig[...], preferred_element_type=jnp.float32) + bsig[...])
    out_sp2[...] = _softplus(
        jnp.dot(hb, wsp2[...], preferred_element_type=jnp.float32) + bsp2[...])


def make_dualnet_params(key, num_agents, num_hidden_nodes):
    """Deterministic synthetic parameters, logical shapes matching the PyTorch module
    (stored pre-transposed as (in_features, out_features))."""
    n = num_agents
    in_dim = 2 * n * n
    facto = math.factorial(n)
    out_dim = 2 * n + n * n + 2 * (facto * n * n)

    dims = [in_dim] + [num_hidden_nodes] * 5
    params = {}
    keys = jax.random.split(key, 12)
    ki = 0
    for layer in range(5):
        fan_in, fan_out = dims[layer], dims[layer + 1]
        scale = 1.0 / math.sqrt(fan_in)
        params[f"w{layer}"] = jax.random.uniform(
            keys[ki], (fan_in, fan_out), jnp.float32, -scale, scale); ki += 1
        params[f"b{layer}"] = jax.random.uniform(
            keys[ki], (1, fan_out), jnp.float32, -scale, scale); ki += 1
    scale = 1.0 / math.sqrt(num_hidden_nodes)
    params["wout"] = jax.random.uniform(
        keys[ki], (num_hidden_nodes, out_dim), jnp.float32, -scale, scale); ki += 1
    params["bout"] = jax.random.uniform(
        keys[ki], (1, out_dim), jnp.float32, -scale, scale); ki += 1
    return params, out_dim


def prepare_kernel_params(params, num_agents, num_hidden_nodes):
    """Offline weight transform:
      * split layer-0 weight into p / q halves (folds the stack interleave),
      * zero-pad hidden width and head columns to multiples of 128 lanes,
      * split the output head into softplus / sigmoid / softplus column groups,
      * cast matmul weights to bf16 (biases stay f32 for the f32 epilogue)."""
    n = num_agents
    h = num_hidden_nodes
    h_pad = _round_up(h, LANE)
    facto = math.factorial(n)
    out_dim = 2 * n + n * n + 2 * facto * n * n
    c0, c1 = 2 * n, 2 * n + n * n
    sp1_pad = _round_up(c0, LANE)
    sig_pad = _round_up(n * n, LANE)
    sp2_pad = _round_up(out_dim - c1, LANE)

    def pad2(a, rows, cols):
        return jnp.pad(a, ((0, rows - a.shape[0]), (0, cols - a.shape[1])))

    kp = {}
    w0 = params["w0"]                                # (2*n*n, h), rows interleaved p/q
    kp["w0p"] = pad2(w0[0::2], n * n, h_pad).astype(jnp.bfloat16)
    kp["w0q"] = pad2(w0[1::2], n * n, h_pad).astype(jnp.bfloat16)
    kp["b0"] = pad2(params["b0"], 1, h_pad)
    for l in range(1, 5):
        kp[f"w{l}"] = pad2(params[f"w{l}"], h_pad, h_pad).astype(jnp.bfloat16)
        kp[f"b{l}"] = pad2(params[f"b{l}"], 1, h_pad)

    wout, bout = params["wout"], params["bout"]
    kp["wsp1"] = pad2(wout[:, :c0], h_pad, sp1_pad).astype(jnp.bfloat16)
    kp["bsp1"] = pad2(bout[:, :c0], 1, sp1_pad)
    kp["wsig"] = pad2(wout[:, c0:c1], h_pad, sig_pad).astype(jnp.bfloat16)
    kp["bsig"] = pad2(bout[:, c0:c1], 1, sig_pad)
    kp["wsp2"] = pad2(wout[:, c1:], h_pad, sp2_pad).astype(jnp.bfloat16)
    kp["bsp2"] = pad2(bout[:, c1:], 1, sp2_pad)

    meta = dict(h_pad=h_pad, sp1_pad=sp1_pad, sig_pad=sig_pad,
                sp2_pad=sp2_pad, out_dim=out_dim)
    return kp, meta


def _choose_tile_b(batch, in_cols, out_cols, h_pad, io_budget_bytes=16 << 20):
    # double-buffered f32 input + output rows plus a few hidden temporaries
    per_row = 2 * 4 * (in_cols + out_cols) + 4 * 4 * h_pad
    tile = io_budget_bytes // max(per_row, 1)
    tile = max(SUBLANE, min(512, (tile // SUBLANE) * SUBLANE))
    return min(tile, _round_up(batch, SUBLANE))


def _vmem_limit_bytes(param_arrays, tile_b, in_cols, out_cols, h_pad):
    w_bytes = sum(int(a.size) * a.dtype.itemsize for a in param_arrays)
    io_bytes = 2 * 4 * tile_b * (in_cols + out_cols)     # double-buffered I/O blocks
    act_bytes = 4 * 4 * tile_b * h_pad                   # intermediate activations
    est = w_bytes + io_bytes + act_bytes
    # ~2x headroom, capped well under v7x's 64 MiB physical VMEM per core
    return int(min(max(2 * est + (4 << 20), 16 << 20), 48 << 20))


def dualnet_forward(p, q, kparams, meta, num_agents):
    n = num_agents
    facto = math.factorial(n)
    batch = p.shape[0]

    p_flat = p.reshape(batch, n * n)
    q_flat = q.reshape(batch, n * n)

    in_cols = 2 * n * n
    out_cols = meta["sp1_pad"] + meta["sig_pad"] + meta["sp2_pad"]
    tile_b = _choose_tile_b(batch, in_cols, out_cols, meta["h_pad"])
    grid = (pl.cdiv(batch, tile_b),)

    def row_spec(cols):
        return pl.BlockSpec((tile_b, cols), lambda i: (i, 0))

    def resident_spec(arr):
        # full-array block + constant index_map => stays VMEM-resident across steps
        return pl.BlockSpec(arr.shape, lambda i: (0, 0))

    ordered = [kparams[k] for k in
               ("w0p", "w0q", "b0", "w1", "b1", "w2", "b2", "w3", "b3",
                "w4", "b4", "wsp1", "bsp1", "wsig", "bsig", "wsp2", "bsp2")]

    in_specs = ([row_spec(n * n), row_spec(n * n)]
                + [resident_spec(a) for a in ordered])
    out_specs = [row_spec(meta["sp1_pad"]),
                 row_spec(meta["sig_pad"]),
                 row_spec(meta["sp2_pad"])]
    out_shape = (jax.ShapeDtypeStruct((batch, meta["sp1_pad"]), jnp.float32),
                 jax.ShapeDtypeStruct((batch, meta["sig_pad"]), jnp.float32),
                 jax.ShapeDtypeStruct((batch, meta["sp2_pad"]), jnp.float32))

    out_sp1, out_sig, out_sp2 = pl.pallas_call(
        dualnet_kernel,
        grid=grid,
        in_specs=in_specs,
        out_specs=out_specs,
        out_shape=out_shape,
        compiler_params=pltpu.CompilerParams(
            dimension_semantics=("parallel",),
            vmem_limit_bytes=_vmem_limit_bytes(
                ordered, tile_b, in_cols, out_cols, meta["h_pad"])),
    )(p_flat, q_flat, *ordered)

    # glue: slice off lane padding and reshape into (x, y, z, u, v)
    x = out_sp1[:, :n]
    y = out_sp1[:, n:2 * n]
    z = out_sig[:, :n * n].reshape(batch, n, n)
    u = out_sp2[:, :facto * n * n].reshape(batch, n, facto, n)
    v = out_sp2[:, facto * n * n:2 * facto * n * n].reshape(batch, n, facto, n)
    return x, y, z, u, v


def dualnet_reference(p, q, params, num_agents):
    """Pure-JAX f32 reference matching the PyTorch module exactly."""
    n = num_agents
    facto = math.factorial(n)
    a = jnp.stack([p, q], axis=-1).reshape(-1, 2 * n * n)
    for l in range(5):
        a = a @ params[f"w{l}"] + params[f"b{l}"]
        a = jnp.where(a > 0, a, 0.01 * a)
    a = a @ params["wout"] + params["bout"]
    sp = lambda t: jnp.maximum(t, 0.0) + jnp.log1p(jnp.exp(-jnp.abs(t)))
    x = sp(a[:, :n])
    y = sp(a[:, n:2 * n])
    z = jax.nn.sigmoid(a[:, 2 * n:2 * n + n * n]).reshape(-1, n, n)
    ofs = 2 * n + n * n
    u = sp(a[:, ofs:ofs + facto * n * n]).reshape(-1, n, facto, n)
    v = sp(a[:, ofs + facto * n * n:]).reshape(-1, n, facto, n)
    return x, y, z, u, v


if __name__ == "__main__":
    NUM_AGENTS = 3          # factorial(3) = 6
    NUM_HIDDEN = 32
    BATCH = 2

    key = jax.random.PRNGKey(0)
    kp_, kq_, kw_ = jax.random.split(key, 3)
    p = jax.random.normal(kp_, (BATCH, NUM_AGENTS, NUM_AGENTS), jnp.float32)
    q = jax.random.normal(kq_, (BATCH, NUM_AGENTS, NUM_AGENTS), jnp.float32)

    params, out_dim = make_dualnet_params(kw_, NUM_AGENTS, NUM_HIDDEN)
    kparams, meta = prepare_kernel_params(params, NUM_AGENTS, NUM_HIDDEN)

    outs = dualnet_forward(p, q, kparams, meta, NUM_AGENTS)
    outs = jax.block_until_ready(outs)
    x, y, z, u, v = outs

    facto = math.factorial(NUM_AGENTS)
    assert x.shape == (BATCH, NUM_AGENTS)
    assert y.shape == (BATCH, NUM_AGENTS)
    assert z.shape == (BATCH, NUM_AGENTS, NUM_AGENTS)
    assert u.shape == (BATCH, NUM_AGENTS, facto, NUM_AGENTS)
    assert v.shape == (BATCH, NUM_AGENTS, facto, NUM_AGENTS)

    # loose numeric check vs a pure-f32 reference (kernel matmuls run in bf16)
    refs = dualnet_reference(p, q, params, NUM_AGENTS)
    for got, ref in zip(outs, refs):
        err = float(jnp.max(jnp.abs(got - ref)))
        assert err < 0.15, f"max abs error too large: {err}"

    print("KERNEL_OK")
</pallas_src>

<mosaic_0001>
module attributes {stable_mosaic.version = 11 : i64} {
  func.func @dualnet_kernel(%arg0: i32, %arg1: memref<8x9xf32, #tpu.memory_space<vmem>>, %arg2: memref<8x9xf32, #tpu.memory_space<vmem>>, %arg3: memref<9x128xbf16, #tpu.memory_space<vmem>>, %arg4: memref<9x128xbf16, #tpu.memory_space<vmem>>, %arg5: memref<1x128xf32, #tpu.memory_space<vmem>>, %arg6: memref<128x128xbf16, #tpu.memory_space<vmem>>, %arg7: memref<1x128xf32, #tpu.memory_space<vmem>>, %arg8: memref<128x128xbf16, #tpu.memory_space<vmem>>, %arg9: memref<1x128xf32, #tpu.memory_space<vmem>>, %arg10: memref<128x128xbf16, #tpu.memory_space<vmem>>, %arg11: memref<1x128xf32, #tpu.memory_space<vmem>>, %arg12: memref<128x128xbf16, #tpu.memory_space<vmem>>, %arg13: memref<1x128xf32, #tpu.memory_space<vmem>>, %arg14: memref<128x128xbf16, #tpu.memory_space<vmem>>, %arg15: memref<1x128xf32, #tpu.memory_space<vmem>>, %arg16: memref<128x128xbf16, #tpu.memory_space<vmem>>, %arg17: memref<1x128xf32, #tpu.memory_space<vmem>>, %arg18: memref<128x128xbf16, #tpu.memory_space<vmem>>, %arg19: memref<1x128xf32, #tpu.memory_space<vmem>>, %arg20: memref<8x128xf32, #tpu.memory_space<vmem>>, %arg21: memref<8x128xf32, #tpu.memory_space<vmem>>, %arg22: memref<8x128xf32, #tpu.memory_space<vmem>>) attributes {dimension_semantics = [#tpu.dimension_semantics<parallel>], iteration_bounds = array<i64: 1>, scalar_prefetch = 0 : i64, scratch_operands = 0 : i64, tpu.core_type = #tpu.core_type<tc>, window_params = [{transform_indices = @transform_0, window_bounds = array<i64: 8, 9>}, {transform_indices = @transform_1, window_bounds = array<i64: 8, 9>}, {pipeline_mode = #tpu.pipeline_mode<synchronous>, transform_indices = @transform_2, window_bounds = array<i64: 9, 128>}, {pipeline_mode = #tpu.pipeline_mode<synchronous>, transform_indices = @transform_3, window_bounds = array<i64: 9, 128>}, {pipeline_mode = #tpu.pipeline_mode<synchronous>, transform_indices = @transform_4, window_bounds = array<i64: 1, 128>}, {pipeline_mode = #tpu.pipeline_mode<synchronous>, transform_indices = @transform_5, window_bounds = array<i64: 128, 128>}, {pipeline_mode = #tpu.pipeline_mode<synchronous>, transform_indices = @transform_6, window_bounds = array<i64: 1, 128>}, {pipeline_mode = #tpu.pipeline_mode<synchronous>, transform_indices = @transform_7, window_bounds = array<i64: 128, 128>}, {pipeline_mode = #tpu.pipeline_mode<synchronous>, transform_indices = @transform_8, window_bounds = array<i64: 1, 128>}, {pipeline_mode = #tpu.pipeline_mode<synchronous>, transform_indices = @transform_9, window_bounds = array<i64: 128, 128>}, {pipeline_mode = #tpu.pipeline_mode<synchronous>, transform_indices = @transform_10, window_bounds = array<i64: 1, 128>}, {pipeline_mode = #tpu.pipeline_mode<synchronous>, transform_indices = @transform_11, window_bounds = array<i64: 128, 128>}, {pipeline_mode = #tpu.pipeline_mode<synchronous>, transform_indices = @transform_12, window_bounds = array<i64: 1, 128>}, {pipeline_mode = #tpu.pipeline_mode<synchronous>, transform_indices = @transform_13, window_bounds = array<i64: 128, 128>}, {pipeline_mode = #tpu.pipeline_mode<synchronous>, transform_indices = @transform_14, window_bounds = array<i64: 1, 128>}, {pipeline_mode = #tpu.pipeline_mode<synchronous>, transform_indices = @transform_15, window_bounds = array<i64: 128, 128>}, {pipeline_mode = #tpu.pipeline_mode<synchronous>, transform_indices = @transform_16, window_bounds = array<i64: 1, 128>}, {pipeline_mode = #tpu.pipeline_mode<synchronous>, transform_indices = @transform_17, window_bounds = array<i64: 128, 128>}, {pipeline_mode = #tpu.pipeline_mode<synchronous>, transform_indices = @transform_18, window_bounds = array<i64: 1, 128>}, {transform_indices = @transform_19, window_bounds = array<i64: 8, 128>}, {transform_indices = @transform_20, window_bounds = array<i64: 8, 128>}, {transform_indices = @transform_21, window_bounds = array<i64: 8, 128>}]} {
    %c0 = arith.constant 0 : index
    %c0_0 = arith.constant 0 : index
    %0 = vector.load %arg1[%c0, %c0_0] : memref<8x9xf32, #tpu.memory_space<vmem>>, vector<8x9xf32>
    %1 = arith.truncf %0 : vector<8x9xf32> to vector<8x9xbf16>
    %c0_1 = arith.constant 0 : index
    %c0_2 = arith.constant 0 : index
    %2 = vector.load %arg2[%c0_1, %c0_2] : memref<8x9xf32, #tpu.memory_space<vmem>>, vector<8x9xf32>
    %3 = arith.truncf %2 : vector<8x9xf32> to vector<8x9xbf16>
    %c0_3 = arith.constant 0 : index
    %c0_4 = arith.constant 0 : index
    %4 = vector.load %arg3[%c0_3, %c0_4] : memref<9x128xbf16, #tpu.memory_space<vmem>>, vector<9x128xbf16>
    %cst = arith.constant dense<0.000000e+00> : vector<8x128xf32>
    %5 = tpu.matmul %1, %4, %cst {dimension_numbers = #tpu.dot_dimension_numbers<[1], [0], [0], [1], [0, 0, 1, 1], [], []>} : vector<8x9xbf16>, vector<9x128xbf16>, vector<8x128xf32> -> vector<8x128xf32>
    %c0_5 = arith.constant 0 : index
    %c0_6 = arith.constant 0 : index
    %6 = vector.load %arg4[%c0_5, %c0_6] : memref<9x128xbf16, #tpu.memory_space<vmem>>, vector<9x128xbf16>
    %cst_7 = arith.constant dense<0.000000e+00> : vector<8x128xf32>
    %7 = tpu.matmul %3, %6, %cst_7 {dimension_numbers = #tpu.dot_dimension_numbers<[1], [0], [0], [1], [0, 0, 1, 1], [], []>} : vector<8x9xbf16>, vector<9x128xbf16>, vector<8x128xf32> -> vector<8x128xf32>
    %8 = arith.addf %5, %7 : vector<8x128xf32>
    %c0_8 = arith.constant 0 : index
    %c0_9 = arith.constant 0 : index
    %9 = vector.load %arg5[%c0_8, %c0_9] : memref<1x128xf32, #tpu.memory_space<vmem>>, vector<1x128xf32>
    %10 = vector.broadcast %9 : vector<1x128xf32> to vector<8x128xf32>
    %11 = arith.addf %8, %10 : vector<8x128xf32>
    %cst_10 = arith.constant 0.000000e+00 : f32
    %12 = vector.broadcast %cst_10 : f32 to vector<8x128xf32>
    %13 = arith.cmpf ogt, %11, %12 : vector<8x128xf32>
    %cst_11 = arith.constant 0.00999999977 : f32
    %14 = vector.broadcast %cst_11 : f32 to vector<8x128xf32>
    %15 = arith.mulf %14, %11 : vector<8x128xf32>
    %16 = arith.select %13, %11, %15 : vector<8x128xi1>, vector<8x128xf32>
    %17 = arith.truncf %16 : vector<8x128xf32> to vector<8x128xbf16>
    %c0_12 = arith.constant 0 : index
    %c0_13 = arith.constant 0 : index
    %18 = vector.load %arg6[%c0_12, %c0_13] : memref<128x128xbf16, #tpu.memory_space<vmem>>, vector<128x128xbf16>
    %cst_14 = arith.constant dense<0.000000e+00> : vector<8x128xf32>
    %19 = tpu.matmul %17, %18, %cst_14 {dimension_numbers = #tpu.dot_dimension_numbers<[1], [0], [0], [1], [0, 0, 1, 1], [], []>} : vector<8x128xbf16>, vector<128x128xbf16>, vector<8x128xf32> -> vector<8x128xf32>
    %c0_15 = arith.constant 0 : index
    %c0_16 = arith.constant 0 : index
    %20 = vector.load %arg7[%c0_15, %c0_16] : memref<1x128xf32, #tpu.memory_space<vmem>>, vector<1x128xf32>
    %21 = vector.broadcast %20 : vector<1x128xf32> to vector<8x128xf32>
    %22 = arith.addf %19, %21 : vector<8x128xf32>
    %cst_17 = arith.constant 0.000000e+00 : f32
    %23 = vector.broadcast %cst_17 : f32 to vector<8x128xf32>
    %24 = arith.cmpf ogt, %22, %23 : vector<8x128xf32>
    %cst_18 = arith.constant 0.00999999977 : f32
    %25 = vector.broadcast %cst_18 : f32 to vector<8x128xf32>
    %26 = arith.mulf %25, %22 : vector<8x128xf32>
    %27 = arith.select %24, %22, %26 : vector<8x128xi1>, vector<8x128xf32>
    %28 = arith.truncf %27 : vector<8x128xf32> to vector<8x128xbf16>
    %c0_19 = arith.constant 0 : index
    %c0_20 = arith.constant 0 : index
    %29 = vector.load %arg8[%c0_19, %c0_20] : memref<128x128xbf16, #tpu.memory_space<vmem>>, vector<128x128xbf16>
    %cst_21 = arith.constant dense<0.000000e+00> : vector<8x128xf32>
    %30 = tpu.matmul %28, %29, %cst_21 {dimension_numbers = #tpu.dot_dimension_numbers<[1], [0], [0], [1], [0, 0, 1, 1], [], []>} : vector<8x128xbf16>, vector<128x128xbf16>, vector<8x128xf32> -> vector<8x128xf32>
    %c0_22 = arith.constant 0 : index
    %c0_23 = arith.constant 0 : index
    %31 = vector.load %arg9[%c0_22, %c0_23] : memref<1x128xf32, #tpu.memory_space<vmem>>, vector<1x128xf32>
    %32 = vector.broadcast %31 : vector<1x128xf32> to vector<8x128xf32>
    %33 = arith.addf %30, %32 : vector<8x128xf32>
    %cst_24 = arith.constant 0.000000e+00 : f32
    %34 = vector.broadcast %cst_24 : f32 to vector<8x128xf32>
    %35 = arith.cmpf ogt, %33, %34 : vector<8x128xf32>
    %cst_25 = arith.constant 0.00999999977 : f32
    %36 = vector.broadcast %cst_25 : f32 to vector<8x128xf32>
    %37 = arith.mulf %36, %33 : vector<8x128xf32>
    %38 = arith.select %35, %33, %37 : vector<8x128xi1>, vector<8x128xf32>
    %39 = arith.truncf %38 : vector<8x128xf32> to vector<8x128xbf16>
    %c0_26 = arith.constant 0 : index
    %c0_27 = arith.constant 0 : index
    %40 = vector.load %arg10[%c0_26, %c0_27] : memref<128x128xbf16, #tpu.memory_space<vmem>>, vector<128x128xbf16>
    %cst_28 = arith.constant dense<0.000000e+00> : vector<8x128xf32>
    %41 = tpu.matmul %39, %40, %cst_28 {dimension_numbers = #tpu.dot_dimension_numbers<[1], [0], [0], [1], [0, 0, 1, 1], [], []>} : vector<8x128xbf16>, vector<128x128xbf16>, vector<8x128xf32> -> vector<8x128xf32>
    %c0_29 = arith.constant 0 : index
    %c0_30 = arith.constant 0 : index
    %42 = vector.load %arg11[%c0_29, %c0_30] : memref<1x128xf32, #tpu.memory_space<vmem>>, vector<1x128xf32>
    %43 = vector.broadcast %42 : vector<1x128xf32> to vector<8x128xf32>
    %44 = arith.addf %41, %43 : vector<8x128xf32>
    %cst_31 = arith.constant 0.000000e+00 : f32
    %45 = vector.broadcast %cst_31 : f32 to vector<8x128xf32>
    %46 = arith.cmpf ogt, %44, %45 : vector<8x128xf32>
    %cst_32 = arith.constant 0.00999999977 : f32
    %47 = vector.broadcast %cst_32 : f32 to vector<8x128xf32>
    %48 = arith.mulf %47, %44 : vector<8x128xf32>
    %49 = arith.select %46, %44, %48 : vector<8x128xi1>, vector<8x128xf32>
    %50 = arith.truncf %49 : vector<8x128xf32> to vector<8x128xbf16>
    %c0_33 = arith.constant 0 : index
    %c0_34 = arith.constant 0 : index
    %51 = vector.load %arg12[%c0_33, %c0_34] : memref<128x128xbf16, #tpu.memory_space<vmem>>, vector<128x128xbf16>
    %cst_35 = arith.constant dense<0.000000e+00> : vector<8x128xf32>
    %52 = tpu.matmul %50, %51, %cst_35 {dimension_numbers = #tpu.dot_dimension_numbers<[1], [0], [0], [1], [0, 0, 1, 1], [], []>} : vector<8x128xbf16>, vector<128x128xbf16>, vector<8x128xf32> -> vector<8x128xf32>
    %c0_36 = arith.constant 0 : index
    %c0_37 = arith.constant 0 : index
    %53 = vector.load %arg13[%c0_36, %c0_37] : memref<1x128xf32, #tpu.memory_space<vmem>>, vector<1x128xf32>
    %54 = vector.broadcast %53 : vector<1x128xf32> to vector<8x128xf32>
    %55 = arith.addf %52, %54 : vector<8x128xf32>
    %cst_38 = arith.constant 0.000000e+00 : f32
    %56 = vector.broadcast %cst_38 : f32 to vector<8x128xf32>
    %57 = arith.cmpf ogt, %55, %56 : vector<8x128xf32>
    %cst_39 = arith.constant 0.00999999977 : f32
    %58 = vector.broadcast %cst_39 : f32 to vector<8x128xf32>
    %59 = arith.mulf %58, %55 : vector<8x128xf32>
    %60 = arith.select %57, %55, %59 : vector<8x128xi1>, vector<8x128xf32>
    %61 = arith.truncf %60 : vector<8x128xf32> to vector<8x128xbf16>
    %c0_40 = arith.constant 0 : index
    %c0_41 = arith.constant 0 : index
    %62 = vector.load %arg14[%c0_40, %c0_41] : memref<128x128xbf16, #tpu.memory_space<vmem>>, vector<128x128xbf16>
    %cst_42 = arith.constant dense<0.000000e+00> : vector<8x128xf32>
    %63 = tpu.matmul %61, %62, %cst_42 {dimension_numbers = #tpu.dot_dimension_numbers<[1], [0], [0], [1], [0, 0, 1, 1], [], []>} : vector<8x128xbf16>, vector<128x128xbf16>, vector<8x128xf32> -> vector<8x128xf32>
    %c0_43 = arith.constant 0 : index
    %c0_44 = arith.constant 0 : index
    %64 = vector.load %arg15[%c0_43, %c0_44] : memref<1x128xf32, #tpu.memory_space<vmem>>, vector<1x128xf32>
    %65 = vector.broadcast %64 : vector<1x128xf32> to vector<8x128xf32>
    %66 = arith.addf %63, %65 : vector<8x128xf32>
    %cst_45 = arith.constant 0.000000e+00 : f32
    %67 = vector.broadcast %cst_45 : f32 to vector<8x128xf32>
    %68 = arith.maximumf %66, %67 : vector<8x128xf32>
    %69 = math.absf %66 : vector<8x128xf32>
    %cst_46 = arith.constant 0.000000e+00 : f32
    %70 = vector.broadcast %cst_46 : f32 to vector<8x128xf32>
    %71 = arith.subf %70, %69 : vector<8x128xf32>
    %72 = math.exp %71 : vector<8x128xf32>
    %73 = math.log1p %72 : vector<8x128xf32>
    %74 = arith.addf %68, %73 : vector<8x128xf32>
    %c0_47 = arith.constant 0 : index
    %c0_48 = arith.constant 0 : index
    %75 = vector.load %arg20[%c0_47, %c0_48] : memref<8x128xf32, #tpu.memory_space<vmem>>, vector<8x128xf32>
    tpu.vector_store %arg20[%c0_47, %c0_48], %74 {strides = array<i32>} : memref<8x128xf32, #tpu.memory_space<vmem>>, vector<8x128xf32>,
    %c0_49 = arith.constant 0 : index
    %c0_50 = arith.constant 0 : index
    %76 = vector.load %arg16[%c0_49, %c0_50] : memref<128x128xbf16, #tpu.memory_space<vmem>>, vector<128x128xbf16>
    %cst_51 = arith.constant dense<0.000000e+00> : vector<8x128xf32>
    %77 = tpu.matmul %61, %76, %cst_51 {dimension_numbers = #tpu.dot_dimension_numbers<[1], [0], [0], [1], [0, 0, 1, 1], [], []>} : vector<8x128xbf16>, vector<128x128xbf16>, vector<8x128xf32> -> vector<8x128xf32>
    %c0_52 = arith.constant 0 : index
    %c0_53 = arith.constant 0 : index
    %78 = vector.load %arg17[%c0_52, %c0_53] : memref<1x128xf32, #tpu.memory_space<vmem>>, vector<1x128xf32>
    %79 = vector.broadcast %78 : vector<1x128xf32> to vector<8x128xf32>
    %80 = arith.addf %77, %79 : vector<8x128xf32>
    %cst_54 = arith.constant 0.000000e+00 : f32
    %81 = vector.broadcast %cst_54 : f32 to vector<8x128xf32>
    %82 = arith.subf %81, %80 : vector<8x128xf32>
    %83 = math.exp %82 : vector<8x128xf32>
    %cst_55 = arith.constant 1.000000e+00 : f32
    %84 = vector.broadcast %cst_55 : f32 to vector<8x128xf32>
    %85 = arith.addf %84, %83 : vector<8x128xf32>
    %86 = tpu.reciprocal %85 {approx = true} : vector<8x128xf32> -> vector<8x128xf32>
    %c0_56 = arith.constant 0 : index
    %c0_57 = arith.constant 0 : index
    %87 = vector.load %arg21[%c0_56, %c0_57] : memref<8x128xf32, #tpu.memory_space<vmem>>, vector<8x128xf32>
    tpu.vector_store %arg21[%c0_56, %c0_57], %86 {strides = array<i32>} : memref<8x128xf32, #tpu.memory_space<vmem>>, vector<8x128xf32>,
    %c0_58 = arith.constant 0 : index
    %c0_59 = arith.constant 0 : index
    %88 = vector.load %arg18[%c0_58, %c0_59] : memref<128x128xbf16, #tpu.memory_space<vmem>>, vector<128x128xbf16>
    %cst_60 = arith.constant dense<0.000000e+00> : vector<8x128xf32>
    %89 = tpu.matmul %61, %88, %cst_60 {dimension_numbers = #tpu.dot_dimension_numbers<[1], [0], [0], [1], [0, 0, 1, 1], [], []>} : vector<8x128xbf16>, vector<128x128xbf16>, vector<8x128xf32> -> vector<8x128xf32>
    %c0_61 = arith.constant 0 : index
    %c0_62 = arith.constant 0 : index
    %90 = vector.load %arg19[%c0_61, %c0_62] : memref<1x128xf32, #tpu.memory_space<vmem>>, vector<1x128xf32>
    %91 = vector.broadcast %90 : vector<1x128xf32> to vector<8x128xf32>
    %92 = arith.addf %89, %91 : vector<8x128xf32>
    %cst_63 = arith.constant 0.000000e+00 : f32
    %93 = vector.broadcast %cst_63 : f32 to vector<8x128xf32>
    %94 = arith.maximumf %92, %93 : vector<8x128xf32>
    %95 = math.absf %92 : vector<8x128xf32>
    %cst_64 = arith.constant 0.000000e+00 : f32
    %96 = vector.broadcast %cst_64 : f32 to vector<8x128xf32>
    %97 = arith.subf %96, %95 : vector<8x128xf32>
    %98 = math.exp %97 : vector<8x128xf32>
    %99 = math.log1p %98 : vector<8x128xf32>
    %100 = arith.addf %94, %99 : vector<8x128xf32>
    %c0_65 = arith.constant 0 : index
    %c0_66 = arith.constant 0 : index
    %101 = vector.load %arg22[%c0_65, %c0_66] : memref<8x128xf32, #tpu.memory_space<vmem>>, vector<8x128xf32>
    tpu.vector_store %arg22[%c0_65, %c0_66], %100 {strides = array<i32>} : memref<8x128xf32, #tpu.memory_space<vmem>>, vector<8x128xf32>,
    return
  }
  func.func @transform_0(%arg0: i32) -> (i32, i32) {
    %c0_i32 = arith.constant 0 : i32
    %c0_i32_0 = arith.constant 0 : i32
    return %arg0, %c0_i32 : i32, i32
  }
  func.func @transform_1(%arg0: i32) -> (i32, i32) {
    %c0_i32 = arith.constant 0 : i32
    %c0_i32_0 = arith.constant 0 : i32
    return %arg0, %c0_i32 : i32, i32
  }
  func.func @transform_2(%arg0: i32) -> (i32, i32) {
    %c0_i32 = arith.constant 0 : i32
    %c0_i32_0 = arith.constant 0 : i32
    %c0_i32_1 = arith.constant 0 : i32
    return %c0_i32, %c0_i32_0 : i32, i32
  }
  func.func @transform_3(%arg0: i32) -> (i32, i32) {
    %c0_i32 = arith.constant 0 : i32
    %c0_i32_0 = arith.constant 0 : i32
    %c0_i32_1 = arith.constant 0 : i32
    return %c0_i32, %c0_i32_0 : i32, i32
  }
  func.func @transform_4(%arg0: i32) -> (i32, i32) {
    %c0_i32 = arith.constant 0 : i32
    %c0_i32_0 = arith.constant 0 : i32
    %c0_i32_1 = arith.constant 0 : i32
    return %c0_i32, %c0_i32_0 : i32, i32
  }
  func.func @transform_5(%arg0: i32) -> (i32, i32) {
    %c0_i32 = arith.constant 0 : i32
    %c0_i32_0 = arith.constant 0 : i32
    %c0_i32_1 = arith.constant 0 : i32
    return %c0_i32, %c0_i32_0 : i32, i32
  }
  func.func @transform_6(%arg0: i32) -> (i32, i32) {
    %c0_i32 = arith.constant 0 : i32
    %c0_i32_0 = arith.constant 0 : i32
    %c0_i32_1 = arith.constant 0 : i32
    return %c0_i32, %c0_i32_0 : i32, i32
  }
  func.func @transform_7(%arg0: i32) -> (i32, i32) {
    %c0_i32 = arith.constant 0 : i32
    %c0_i32_0 = arith.constant 0 : i32
    %c0_i32_1 = arith.constant 0 : i32
    return %c0_i32, %c0_i32_0 : i32, i32
  }
  func.func @transform_8(%arg0: i32) -> (i32, i32) {
    %c0_i32 = arith.constant 0 : i32
    %c0_i32_0 = arith.constant 0 : i32
    %c0_i32_1 = arith.constant 0 : i32
    return %c0_i32, %c0_i32_0 : i32, i32
  }
  func.func @transform_9(%arg0: i32) -> (i32, i32) {
    %c0_i32 = arith.constant 0 : i32
    %c0_i32_0 = arith.constant 0 : i32
    %c0_i32_1 = arith.constant 0 : i32
    return %c0_i32, %c0_i32_0 : i32, i32
  }
  func.func @transform_10(%arg0: i32) -> (i32, i32) {
    %c0_i32 = arith.constant 0 : i32
    %c0_i32_0 = arith.constant 0 : i32
    %c0_i32_1 = arith.constant 0 : i32
    return %c0_i32, %c0_i32_0 : i32, i32
  }
  func.func @transform_11(%arg0: i32) -> (i32, i32) {
    %c0_i32 = arith.constant 0 : i32
    %c0_i32_0 = arith.constant 0 : i32
    %c0_i32_1 = arith.constant 0 : i32
    return %c0_i32, %c0_i32_0 : i32, i32
  }
  func.func @transform_12(%arg0: i32) -> (i32, i32) {
    %c0_i32 = arith.constant 0 : i32
    %c0_i32_0 = arith.constant 0 : i32
    %c0_i32_1 = arith.constant 0 : i32
    return %c0_i32, %c0_i32_0 : i32, i32
  }
  func.func @transform_13(%arg0: i32) -> (i32, i32) {
    %c0_i32 = arith.constant 0 : i32
    %c0_i32_0 = arith.constant 0 : i32
    %c0_i32_1 = arith.constant 0 : i32
    return %c0_i32, %c0_i32_0 : i32, i32
  }
  func.func @transform_14(%arg0: i32) -> (i32, i32) {
    %c0_i32 = arith.constant 0 : i32
    %c0_i32_0 = arith.constant 0 : i32
    %c0_i32_1 = arith.constant 0 : i32
    return %c0_i32, %c0_i32_0 : i32, i32
  }
  func.func @transform_15(%arg0: i32) -> (i32, i32) {
    %c0_i32 = arith.constant 0 : i32
    %c0_i32_0 = arith.constant 0 : i32
    %c0_i32_1 = arith.constant 0 : i32
    return %c0_i32, %c0_i32_0 : i32, i32
  }
  func.func @transform_16(%arg0: i32) -> (i32, i32) {
    %c0_i32 = arith.constant 0 : i32
    %c0_i32_0 = arith.constant 0 : i32
    %c0_i32_1 = arith.constant 0 : i32
    return %c0_i32, %c0_i32_0 : i32, i32
  }
  func.func @transform_17(%arg0: i32) -> (i32, i32) {
    %c0_i32 = arith.constant 0 : i32
    %c0_i32_0 = arith.constant 0 : i32
    %c0_i32_1 = arith.constant 0 : i32
    return %c0_i32, %c0_i32_0 : i32, i32
  }
  func.func @transform_18(%arg0: i32) -> (i32, i32) {
    %c0_i32 = arith.constant 0 : i32
    %c0_i32_0 = arith.constant 0 : i32
    %c0_i32_1 = arith.constant 0 : i32
    return %c0_i32, %c0_i32_0 : i32, i32
  }
  func.func @transform_19(%arg0: i32) -> (i32, i32) {
    %c0_i32 = arith.constant 0 : i32
    %c0_i32_0 = arith.constant 0 : i32
    return %arg0, %c0_i32 : i32, i32
  }
  func.func @transform_20(%arg0: i32) -> (i32, i32) {
    %c0_i32 = arith.constant 0 : i32
    %c0_i32_0 = arith.constant 0 : i32
    return %arg0, %c0_i32 : i32, i32
  }
  func.func @transform_21(%arg0: i32) -> (i32, i32) {
    %c0_i32 = arith.constant 0 : i32
    %c0_i32_0 = arith.constant 0 : i32
    return %arg0, %c0_i32 : i32, i32
  }
}

</mosaic_0001>

<llo_original>
// kernel: tpu_custom_call.1
$region0: #{tpu_custom_call.1}
  #allocation0 [shape = 'u32[]', space=smem, size = 0x4, offset = 0x4, fixed_abs, tag = 'smem constant byte address 0x4 - core index']
  #allocation1 [shape = 'u32[144,128]{1,0:T(1,128)}', space=vmem, size = 0x12000, scoped, tag = 'internal scratch']
  %s0 = inlined_call_operand.hbm [shape: f32[2,9], index: 0, kind: input, shape index: {}]
  %s1 = inlined_call_operand.hbm [shape: f32[2,9], index: 1, kind: input, shape index: {}]
  %s2 = inlined_call_operand.hbm [shape: bf16[9,128], index: 2, kind: input, shape index: {}]
  %s3 = inlined_call_operand.hbm [shape: bf16[9,128], index: 3, kind: input, shape index: {}]
  %s4 = inlined_call_operand.hbm [shape: f32[1,128], index: 4, kind: input, shape index: {}]
  %s5 = inlined_call_operand.hbm [shape: bf16[128,128], index: 5, kind: input, shape index: {}]
  %s6 = inlined_call_operand.hbm [shape: f32[1,128], index: 6, kind: input, shape index: {}]
  %s7 = inlined_call_operand.hbm [shape: bf16[128,128], index: 7, kind: input, shape index: {}]
  %s8 = inlined_call_operand.hbm [shape: f32[1,128], index: 8, kind: input, shape index: {}]
  %s9 = inlined_call_operand.hbm [shape: bf16[128,128], index: 9, kind: input, shape index: {}]
  %s10 = inlined_call_operand.hbm [shape: f32[1,128], index: 10, kind: input, shape index: {}]
  %s11 = inlined_call_operand.hbm [shape: bf16[128,128], index: 11, kind: input, shape index: {}]
  %s12 = inlined_call_operand.hbm [shape: f32[1,128], index: 12, kind: input, shape index: {}]
  %s13 = inlined_call_operand.hbm [shape: bf16[128,128], index: 13, kind: input, shape index: {}]
  %s14 = inlined_call_operand.hbm [shape: f32[1,128], index: 14, kind: input, shape index: {}]
  %s15 = inlined_call_operand.hbm [shape: bf16[128,128], index: 15, kind: input, shape index: {}]
  %s16 = inlined_call_operand.hbm [shape: f32[1,128], index: 16, kind: input, shape index: {}]
  %s17 = inlined_call_operand.vmem [shape: bf16[128,128], index: 17, kind: input, shape index: {}]
  %s18 = inlined_call_operand.vmem [shape: f32[1,128], index: 18, kind: input, shape index: {}]
  %s19 = inlined_call_operand.hbm [shape: f32[2,128], index: 19, kind: output, shape index: {0}]
  %s20 = inlined_call_operand.hbm [shape: f32[2,128], index: 20, kind: output, shape index: {1}]
  %s21 = inlined_call_operand.hbm [shape: f32[2,128], index: 21, kind: output, shape index: {2}]
  %22 = xla_tuple %s19, %s20, %s21
  %s23 = sld [smem:[#allocation0]]
  $region170: #{tpu_custom_call.1} parent=0
    _
  %s25 = ssub.s32 1, %s23
  %s26 = scalar_select 0, %s25, %s23
  $region1: #{tpu_custom_call.1} parent=0
    #allocation2 [shape = 'u8[4096]{0}', space=vmem, size = 0x1000, scoped, tag = 'input window, operand 0, single buffered']
    #allocation3 [shape = 's32[1]{0}', space=sflag, size = 0x4, scoped, tag = 'scoped memory for tpu_custom_call.1']
    #allocation4 [shape = 's32[1]{0}', space=sflag, size = 0x4, scoped, tag = 'scoped memory for tpu_custom_call.1']
    #allocation5 [shape = 'u8[4096]{0}', space=vmem, size = 0x1000, scoped, tag = 'input window, operand 1, single buffered']
    #allocation6 [shape = 's32[1]{0}', space=sflag, size = 0x4, scoped, tag = 'scoped memory for tpu_custom_call.1']
    #allocation7 [shape = 'u8[4096]{0}', space=vmem, size = 0x1000, scoped, tag = 'input window, operand 2, single buffered']
    #allocation8 [shape = 'u8[4096]{0}', space=vmem, size = 0x1000, scoped, tag = 'input window, operand 3, single buffered']
    #allocation9 [shape = 's32[1]{0}', space=sflag, size = 0x4, scoped, tag = 'scoped memory for tpu_custom_call.1']
    #allocation10 [shape = 'u8[512]{0}', space=vmem, size = 0x400, scoped, tag = 'input window, operand 4, single buffered']
    #allocation11 [shape = 'u8[32768]{0}', space=vmem, size = 0x8000, scoped, tag = 'input window, operand 5, single buffered']
    #allocation12 [shape = 's32[1]{0}', space=sflag, size = 0x4, scoped, tag = 'scoped memory for tpu_custom_call.1']
    #allocation13 [shape = 'u8[512]{0}', space=vmem, size = 0x400, scoped, tag = 'input window, operand 6, single buffered']
    #allocation14 [shape = 'u8[32768]{0}', space=vmem, size = 0x8000, scoped, tag = 'input window, operand 7, single buffered']
    #allocation15 [shape = 's32[1]{0}', space=sflag, size = 0x4, scoped, tag = 'scoped memory for tpu_custom_call.1']
    #allocation16 [shape = 'u8[512]{0}', space=vmem, size = 0x400, scoped, tag = 'input window, operand 8, single buffered']
    #allocation17 [shape = 'u8[32768]{0}', space=vmem, size = 0x8000, scoped, tag = 'input window, operand 9, single buffered']
    #allocation18 [shape = 's32[1]{0}', space=sflag, size = 0x4, scoped, tag = 'scoped memory for tpu_custom_call.1']
    #allocation19 [shape = 'u8[512]{0}', space=vmem, size = 0x400, scoped, tag = 'input window, operand 10, single buffered']
    #allocation20 [shape = 'u8[32768]{0}', space=vmem, size = 0x8000, scoped, tag = 'input window, operand 11, single buffered']
    #allocation21 [shape = 's32[1]{0}', space=sflag, size = 0x4, scoped, tag = 'scoped memory for tpu_custom_call.1']
    #allocation22 [shape = 'u8[512]{0}', space=vmem, size = 0x400, scoped, tag = 'input window, operand 12, single buffered']
    #allocation23 [shape = 'u8[32768]{0}', space=vmem, size = 0x8000, scoped, tag = 'input window, operand 13, single buffered']
    #allocation24 [shape = 's32[1]{0}', space=sflag, size = 0x4, scoped, tag = 'scoped memory for tpu_custom_call.1']
    #allocation25 [shape = 'u8[512]{0}', space=vmem, size = 0x400, scoped, tag = 'input window, operand 14, single buffered']
    #allocation26 [shape = 'u8[32768]{0}', space=vmem, size = 0x8000, scoped, tag = 'input window, operand 15, single buffered']
    #allocation27 [shape = 's32[1]{0}', space=sflag, size = 0x4, scoped, tag = 'scoped memory for tpu_custom_call.1']
    #allocation28 [shape = 'u8[512]{0}', space=vmem, size = 0x400, scoped, tag = 'input window, operand 16, single buffered']
    #allocation29 [shape = 'u8[4096]{0}', space=vmem, size = 0x1000, scoped, tag = 'output window, operand 0, single buffered']
    #allocation30 [shape = 'u8[4096]{0}', space=vmem, size = 0x1000, scoped, tag = 'output window, operand 1, single buffered']
    #allocation31 [shape = 's32[1]{0}', space=sflag, size = 0x4, scoped, tag = 'scoped memory for tpu_custom_call.1']
    #allocation32 [shape = 'u8[4096]{0}', space=vmem, size = 0x1000, scoped, tag = 'output window, operand 2, single buffered']
    %27 = vsyncpa [#allocation3], 0
    %28 = vsyncpa [#allocation6], 0
    %29 = vsyncpa [#allocation9], 0
    %30 = vsyncpa [#allocation12], 0
    %31 = vsyncpa [#allocation15], 0
    %32 = vsyncpa [#allocation18], 0
    %33 = vsyncpa [#allocation21], 0
    %34 = vsyncpa [#allocation24], 0
    %35 = vsyncpa [#allocation27], 0
    %36 = vsyncpa [#allocation4], 0
    %37 = vsyncpa [#allocation31], 0
    // Predicated region
    $region2: #{tpu_custom_call.1} parent=1 // pred_check
      _
    $region3: #{tpu_custom_call.1} parent=1 // pred_check_branch
      %39 = sbr.rel (0) target = $region5
    $region4: #{tpu_custom_call.1} parent=1 // pred_region
      %s41 = ssub.s32 128, 32
      %42 = vsyncadd [#allocation3], %s41
      %s43 = sshll.u32 [#allocation2], 4
      %s44 = int_to_ptr.vmem [resolvable:$true] %s43
      %49 = dma.hbm_to_vmem [thread:$0]  %s0, 32, %s44, [#allocation3], 32, 32, 2
    $region5: #{tpu_custom_call.1} parent=1 // pred_fallthru
      _
    // Predicated region
    $region6: #{tpu_custom_call.1} parent=1 // pred_check
      _
    $region7: #{tpu_custom_call.1} parent=1 // pred_check_branch
      %51 = sbr.rel (0) target = $region9
    $region8: #{tpu_custom_call.1} parent=1 // pred_region
      %s53 = ssub.s32 128, 32
      %54 = vsyncadd [#allocation6], %s53
      %s55 = sshll.u32 [#allocation5], 4
      %s56 = int_to_ptr.vmem [resolvable:$true] %s55
      %61 = dma.hbm_to_vmem [thread:$0]  %s1, 32, %s56, [#allocation6], 32, 32, 2
    $region9: #{tpu_custom_call.1} parent=1 // pred_fallthru
      _
    // Predicated region
    $region10: #{tpu_custom_call.1} parent=1 // pred_check
      _
    $region11: #{tpu_custom_call.1} parent=1 // pred_check_branch
      %63 = sbr.rel (0) target = $region13
    $region12: #{tpu_custom_call.1} parent=1 // pred_region
      %s65 = ssub.s32 128, 128
      %66 = vsyncadd [#allocation6], %s65
      %s67 = sshll.u32 [#allocation7], 4
      %s68 = int_to_ptr.vmem [resolvable:$true] %s67
      %73 = dma.hbm_to_vmem [thread:$0]  %s2, 128, %s68, [#allocation6], 64, 64, 4
    $region13: #{tpu_custom_call.1} parent=1 // pred_fallthru
      _
    // Predicated region
    $region14: #{tpu_custom_call.1} parent=1 // pred_check
      _
    $region15: #{tpu_custom_call.1} parent=1 // pred_check_branch
      %75 = sbr.rel (0) target = $region17
    $region16: #{tpu_custom_call.1} parent=1 // pred_region
      %s77 = ssub.s32 128, 128
      %78 = vsyncadd [#allocation9], %s77
      %s79 = sshll.u32 [#allocation8], 4
      %s80 = int_to_ptr.vmem [resolvable:$true] %s79
      %85 = dma.hbm_to_vmem [thread:$0]  %s3, 128, %s80, [#allocation9], 64, 64, 4
    $region17: #{tpu_custom_call.1} parent=1 // pred_fallthru
      _
    // Predicated region
    $region18: #{tpu_custom_call.1} parent=1 // pred_check
      _
    $region19: #{tpu_custom_call.1} parent=1 // pred_check_branch
      %87 = sbr.rel (0) target = $region21
    $region20: #{tpu_custom_call.1} parent=1 // pred_region
      %s89 = ssub.s32 16, 16
      %90 = vsyncadd [#allocation9], %s89
      %s92 = sshll.u32 [#allocation10], 4
      %s93 = int_to_ptr.vmem [resolvable:$true] %s92
      %95 = dma.hbm_to_vmem [thread:$0]  %s4, 16, %s93, [#allocation9]
    $region21: #{tpu_custom_call.1} parent=1 // pred_fallthru
      _
    // Predicated region
    $region22: #{tpu_custom_call.1} parent=1 // pred_check
      _
    $region23: #{tpu_custom_call.1} parent=1 // pred_check_branch
      %97 = sbr.rel (0) target = $region25
    $region24: #{tpu_custom_call.1} parent=1 // pred_region
      %s99 = ssub.s32 1024, 1024
      %100 = vsyncadd [#allocation12], %s99
      %s101 = sshll.u32 [#allocation11], 4
      %s102 = int_to_ptr.vmem [resolvable:$true] %s101
      %107 = dma.hbm_to_vmem [thread:$0]  %s5, 1024, %s102, [#allocation12], 64, 64, 4
    $region25: #{tpu_custom_call.1} parent=1 // pred_fallthru
      _
    // Predicated region
    $region26: #{tpu_custom_call.1} parent=1 // pred_check
      _
    $region27: #{tpu_custom_call.1} parent=1 // pred_check_branch
      %109 = sbr.rel (0) target = $region29
    $region28: #{tpu_custom_call.1} parent=1 // pred_region
      %s111 = ssub.s32 16, 16
      %112 = vsyncadd [#allocation12], %s111
      %s114 = sshll.u32 [#allocation13], 4
      %s115 = int_to_ptr.vmem [resolvable:$true] %s114
      %117 = dma.hbm_to_vmem [thread:$0]  %s6, 16, %s115, [#allocation12]
    $region29: #{tpu_custom_call.1} parent=1 // pred_fallthru
      _
    // Predicated region
    $region30: #{tpu_custom_call.1} parent=1 // pred_check
      _
    $region31: #{tpu_custom_call.1} parent=1 // pred_check_branch
      %119 = sbr.rel (0) target = $region33
    $region32: #{tpu_custom_call.1} parent=1 // pred_region
      %s121 = ssub.s32 1024, 1024
      %122 = vsyncadd [#allocation15], %s121
      %s123 = sshll.u32 [#allocation14], 4
      %s124 = int_to_ptr.vmem [resolvable:$true] %s123
      %129 = dma.hbm_to_vmem [thread:$0]  %s7, 1024, %s124, [#allocation15], 64, 64, 4
    $region33: #{tpu_custom_call.1} parent=1 // pred_fallthru
      _
    // Predicated region
    $region34: #{tpu_custom_call.1} parent=1 // pred_check
      _
    $region35: #{tpu_custom_call.1} parent=1 // pred_check_branch
      %131 = sbr.rel (0) target = $region37
    $region36: #{tpu_custom_call.1} parent=1 // pred_region
      %s133 = ssub.s32 16, 16
      %134 = vsyncadd [#allocation15], %s133
      %s136 = sshll.u32 [#allocation16], 4
      %s137 = int_to_ptr.vmem [resolvable:$true] %s136
      %139 = dma.hbm_to_vmem [thread:$0]  %s8, 16, %s137, [#allocation15]
    $region37: #{tpu_custom_call.1} parent=1 // pred_fallthru
      _
    // Predicated region
    $region38: #{tpu_custom_call.1} parent=1 // pred_check
      _
    $region39: #{tpu_custom_call.1} parent=1 // pred_check_branch
      %141 = sbr.rel (0) target = $region41
    $region40: #{tpu_custom_call.1} parent=1 // pred_region
      %s143 = ssub.s32 1024, 1024
      %144 = vsyncadd [#allocation18], %s143
      %s145 = sshll.u32 [#allocation17], 4
      %s146 = int_to_ptr.vmem [resolvable:$true] %s145
      %151 = dma.hbm_to_vmem [thread:$0]  %s9, 1024, %s146, [#allocation18], 64, 64, 4
    $region41: #{tpu_custom_call.1} parent=1 // pred_fallthru
      _
    // Predicated region
    $region42: #{tpu_custom_call.1} parent=1 // pred_check
      _
    $region43: #{tpu_custom_call.1} parent=1 // pred_check_branch
      %153 = sbr.rel (0) target = $region45
    $region44: #{tpu_custom_call.1} parent=1 // pred_region
      %s155 = ssub.s32 16, 16
      %156 = vsyncadd [#allocation18], %s155
      %s158 = sshll.u32 [#allocation19], 4
      %s159 = int_to_ptr.vmem [resolvable:$true] %s158
      %161 = dma.hbm_to_vmem [thread:$0]  %s10, 16, %s159, [#allocation18]
    $region45: #{tpu_custom_call.1} parent=1 // pred_fallthru
      _
    // Predicated region
    $region46: #{tpu_custom_call.1} parent=1 // pred_check
      _
    $region47: #{tpu_custom_call.1} parent=1 // pred_check_branch
      %163 = sbr.rel (0) target = $region49
    $region48: #{tpu_custom_call.1} parent=1 // pred_region
      %s165 = ssub.s32 1024, 1024
      %166 = vsyncadd [#allocation21], %s165
      %s167 = sshll.u32 [#allocation20], 4
      %s168 = int_to_ptr.vmem [resolvable:$true] %s167
      %173 = dma.hbm_to_vmem [thread:$0]  %s11, 1024, %s168, [#allocation21], 64, 64, 4
    $region49: #{tpu_custom_call.1} parent=1 // pred_fallthru
      _
    // Predicated region
    $region50: #{tpu_custom_call.1} parent=1 // pred_check
      _
    $region51: #{tpu_custom_call.1} parent=1 // pred_check_branch
      %175 = sbr.rel (0) target = $region53
    $region52: #{tpu_custom_call.1} parent=1 // pred_region
      %s177 = ssub.s32 16, 16
      %178 = vsyncadd [#allocation21], %s177
      %s180 = sshll.u32 [#allocation22], 4
      %s181 = int_to_ptr.vmem [resolvable:$true] %s180
      %183 = dma.hbm_to_vmem [thread:$0]  %s12, 16, %s181, [#allocation21]
    $region53: #{tpu_custom_call.1} parent=1 // pred_fallthru
      _
    // Predicated region
    $region54: #{tpu_custom_call.1} parent=1 // pred_check
      _
    $region55: #{tpu_custom_call.1} parent=1 // pred_check_branch
      %185 = sbr.rel (0) target = $region57
    $region56: #{tpu_custom_call.1} parent=1 // pred_region
      %s187 = ssub.s32 1024, 1024
      %188 = vsyncadd [#allocation24], %s187
      %s189 = sshll.u32 [#allocation23], 4
      %s190 = int_to_ptr.vmem [resolvable:$true] %s189
      %195 = dma.hbm_to_vmem [thread:$0]  %s13, 1024, %s190, [#allocation24], 64, 64, 4
    $region57: #{tpu_custom_call.1} parent=1 // pred_fallthru
      _
    // Predicated region
    $region58: #{tpu_custom_call.1} parent=1 // pred_check
      _
    $region59: #{tpu_custom_call.1} parent=1 // pred_check_branch
      %197 = sbr.rel (0) target = $region61
    $region60: #{tpu_custom_call.1} parent=1 // pred_region
      %s199 = ssub.s32 16, 16
      %200 = vsyncadd [#allocation24], %s199
      %s202 = sshll.u32 [#allocation25], 4
      %s203 = int_to_ptr.vmem [resolvable:$true] %s202
      %205 = dma.hbm_to_vmem [thread:$0]  %s14, 16, %s203, [#allocation24]
    $region61: #{tpu_custom_call.1} parent=1 // pred_fallthru
      _
    // Predicated region
    $region62: #{tpu_custom_call.1} parent=1 // pred_check
      _
    $region63: #{tpu_custom_call.1} parent=1 // pred_check_branch
      %207 = sbr.rel (0) target = $region65
    $region64: #{tpu_custom_call.1} parent=1 // pred_region
      %s209 = ssub.s32 1024, 1024
      %210 = vsyncadd [#allocation27], %s209
      %s211 = sshll.u32 [#allocation26], 4
      %s212 = int_to_ptr.vmem [resolvable:$true] %s211
      %217 = dma.hbm_to_vmem [thread:$0]  %s15, 1024, %s212, [#allocation27], 64, 64, 4
    $region65: #{tpu_custom_call.1} parent=1 // pred_fallthru
      _
    // Predicated region
    $region66: #{tpu_custom_call.1} parent=1 // pred_check
      _
    $region67: #{tpu_custom_call.1} parent=1 // pred_check_branch
      %219 = sbr.rel (0) target = $region69
    $region68: #{tpu_custom_call.1} parent=1 // pred_region
      %s221 = ssub.s32 16, 16
      %222 = vsyncadd [#allocation27], %s221
      %s224 = sshll.u32 [#allocation28], 4
      %s225 = int_to_ptr.vmem [resolvable:$true] %s224
      %227 = dma.hbm_to_vmem [thread:$0]  %s16, 16, %s225, [#allocation27]
    $region69: #{tpu_custom_call.1} parent=1 // pred_fallthru
      _
    // Predicated region
    $region70: #{tpu_custom_call.1} parent=1 // pred_check
      _
    $region71: #{tpu_custom_call.1} parent=1 // pred_check_branch
      %229 = sbr.rel (0) target = $region73
    $region72: #{tpu_custom_call.1} parent=1 // pred_region
      _
    $region73: #{tpu_custom_call.1} parent=1 // pred_fallthru
      _
    // Predicated region
    $region74: #{tpu_custom_call.1} parent=1 // pred_check
      _
    $region75: #{tpu_custom_call.1} parent=1 // pred_check_branch
      %231 = sbr.rel (0) target = $region77
    $region76: #{tpu_custom_call.1} parent=1 // pred_region
      _
    $region77: #{tpu_custom_call.1} parent=1 // pred_fallthru
      _
    // Predicated region
    $region78: #{tpu_custom_call.1} parent=1 // pred_check
      _
    $region79: #{tpu_custom_call.1} parent=1 // pred_check_branch
      %233 = sbr.rel (0) target = $region81
    $region80: #{tpu_custom_call.1} parent=1 // pred_region
      %234 = dma.done [#allocation3], 128
    $region81: #{tpu_custom_call.1} parent=1 // pred_fallthru
      _
    // Predicated region
    $region82: #{tpu_custom_call.1} parent=1 // pred_check
      _
    $region83: #{tpu_custom_call.1} parent=1 // pred_check_branch
      %236 = sbr.rel (0) target = $region85
    $region84: #{tpu_custom_call.1} parent=1 // pred_region
      %237 = dma.done [#allocation6], 128
    $region85: #{tpu_custom_call.1} parent=1 // pred_fallthru
      _
    // Predicated region
    $region86: #{tpu_custom_call.1} parent=1 // pred_check
      _
    $region87: #{tpu_custom_call.1} parent=1 // pred_check_branch
      %239 = sbr.rel (0) target = $region89
    $region88: #{tpu_custom_call.1} parent=1 // pred_region
      %240 = dma.done [#allocation6], 128
    $region89: #{tpu_custom_call.1} parent=1 // pred_fallthru
      _
    // Predicated region
    $region90: #{tpu_custom_call.1} parent=1 // pred_check
      _
    $region91: #{tpu_custom_call.1} parent=1 // pred_check_branch
      %242 = sbr.rel (0) target = $region93
    $region92: #{tpu_custom_call.1} parent=1 // pred_region
      %243 = dma.done [#allocation9], 128
    $region93: #{tpu_custom_call.1} parent=1 // pred_fallthru
      _
    // Predicated region
    $region94: #{tpu_custom_call.1} parent=1 // pred_check
      _
    $region95: #{tpu_custom_call.1} parent=1 // pred_check_branch
      %245 = sbr.rel (0) target = $region97
    $region96: #{tpu_custom_call.1} parent=1 // pred_region
      %246 = dma.done [#allocation9], 16
    $region97: #{tpu_custom_call.1} parent=1 // pred_fallthru
      _
    // Predicated region
    $region98: #{tpu_custom_call.1} parent=1 // pred_check
      _
    $region99: #{tpu_custom_call.1} parent=1 // pred_check_branch
      %248 = sbr.rel (0) target = $region101
    $region100: #{tpu_custom_call.1} parent=1 // pred_region
      %249 = dma.done [#allocation12], 1024
    $region101: #{tpu_custom_call.1} parent=1 // pred_fallthru
      _
    // Predicated region
    $region102: #{tpu_custom_call.1} parent=1 // pred_check
      _
    $region103: #{tpu_custom_call.1} parent=1 // pred_check_branch
      %251 = sbr.rel (0) target = $region105
    $region104: #{tpu_custom_call.1} parent=1 // pred_region
      %252 = dma.done [#allocation12], 16
    $region105: #{tpu_custom_call.1} parent=1 // pred_fallthru
      _
    // Predicated region
    $region106: #{tpu_custom_call.1} parent=1 // pred_check
      _
    $region107: #{tpu_custom_call.1} parent=1 // pred_check_branch
      %254 = sbr.rel (0) target = $region109
    $region108: #{tpu_custom_call.1} parent=1 // pred_region
      %255 = dma.done [#allocation15], 1024
    $region109: #{tpu_custom_call.1} parent=1 // pred_fallthru
      _
    // Predicated region
    $region110: #{tpu_custom_call.1} parent=1 // pred_check
      _
    $region111: #{tpu_custom_call.1} parent=1 // pred_check_branch
      %257 = sbr.rel (0) target = $region113
    $region112: #{tpu_custom_call.1} parent=1 // pred_region
      %258 = dma.done [#allocation15], 16
    $region113: #{tpu_custom_call.1} parent=1 // pred_fallthru
      _
    // Predicated region
    $region114: #{tpu_custom_call.1} parent=1 // pred_check
      _
    $region115: #{tpu_custom_call.1} parent=1 // pred_check_branch
      %260 = sbr.rel (0) target = $region117
    $region116: #{tpu_custom_call.1} parent=1 // pred_region
      %261 = dma.done [#allocation18], 1024
    $region117: #{tpu_custom_call.1} parent=1 // pred_fallthru
      _
    // Predicated region
    $region118: #{tpu_custom_call.1} parent=1 // pred_check
      _
    $region119: #{tpu_custom_call.1} parent=1 // pred_check_branch
      %263 = sbr.rel (0) target = $region121
    $region120: #{tpu_custom_call.1} parent=1 // pred_region
      %264 = dma.done [#allocation18], 16
    $region121: #{tpu_custom_call.1} parent=1 // pred_fallthru
      _
    // Predicated region
    $region122: #{tpu_custom_call.1} parent=1 // pred_check
      _
    $region123: #{tpu_custom_call.1} parent=1 // pred_check_branch
      %266 = sbr.rel (0) target = $region125
    $region124: #{tpu_custom_call.1} parent=1 // pred_region
      %267 = dma.done [#allocation21], 1024
    $region125: #{tpu_custom_call.1} parent=1 // pred_fallthru
      _
    // Predicated region
    $region126: #{tpu_custom_call.1} parent=1 // pred_check
      _
    $region127: #{tpu_custom_call.1} parent=1 // pred_check_branch
      %269 = sbr.rel (0) target = $region129
    $region128: #{tpu_custom_call.1} parent=1 // pred_region
      %270 = dma.done [#allocation21], 16
    $region129: #{tpu_custom_call.1} parent=1 // pred_fallthru
      _
    // Predicated region
    $region130: #{tpu_custom_call.1} parent=1 // pred_check
      _
    $region131: #{tpu_custom_call.1} parent=1 // pred_check_branch
      %272 = sbr.rel (0) target = $region133
    $region132: #{tpu_custom_call.1} parent=1 // pred_region
      %273 = dma.done [#allocation24], 1024
    $region133: #{tpu_custom_call.1} parent=1 // pred_fallthru
      _
    // Predicated region
    $region134: #{tpu_custom_call.1} parent=1 // pred_check
      _
    $region135: #{tpu_custom_call.1} parent=1 // pred_check_branch
      %275 = sbr.rel (0) target = $region137
    $region136: #{tpu_custom_call.1} parent=1 // pred_region
      %276 = dma.done [#allocation24], 16
    $region137: #{tpu_custom_call.1} parent=1 // pred_fallthru
      _
    // Predicated region
    $region138: #{tpu_custom_call.1} parent=1 // pred_check
      _
    $region139: #{tpu_custom_call.1} parent=1 // pred_check_branch
      %278 = sbr.rel (0) target = $region141
    $region140: #{tpu_custom_call.1} parent=1 // pred_region
      %279 = dma.done [#allocation27], 1024
    $region141: #{tpu_custom_call.1} parent=1 // pred_fallthru
      _
    // Predicated region
    $region142: #{tpu_custom_call.1} parent=1 // pred_check
      _
    $region143: #{tpu_custom_call.1} parent=1 // pred_check_branch
      %281 = sbr.rel (0) target = $region145
    $region144: #{tpu_custom_call.1} parent=1 // pred_region
      %282 = dma.done [#allocation27], 16
    $region145: #{tpu_custom_call.1} parent=1 // pred_fallthru
      _
    %v284 = vld [vmem:[#allocation2] sm:$0xff]
    %v285 = vpack.c.bf16 %v284, %v284
    %v286 = vld [vmem:[#allocation5] sm:$0xff]
    %v287 = vpack.c.bf16 %v286, %v286
    %v288 = vld [vmem:[#allocation7] sm:$0xf]
    %v289 = vld [vmem:[#allocation7 + $0x4] sm:$0x1]
    %v290 = vld [vmem:[#allocation8] sm:$0xf]
    %v291 = vld [vmem:[#allocation8 + $0x4] sm:$0x1]
    %v294 = vunpack.c.l.b16 %v290
    %v295 = vunpack.c.l.b16 %v291
    %v296 = vpack.c.b16 %v295, %v294
    %vm297 = vcmask 72704
    %v299 = vsel %vm297, %v287, 0
    %vm301 = vcmask 1043456
    %vm302 = vcmask 1044480
    %v303 = vsel %vm301, 4294967295, 65535
    %v304 = vsel %vm302, %v303, 0
    %v306 = vand.u32 %v296, %v304
    %308 = vmatprep.subr.bf16.mxu0 0
    %309 = vmatpush1.bf16.msra.mxu0 %v306
    %310 = vmatprep.subr.bf16.mxu0 0
    %311 = vmatpush1.bf16.msra.mxu0 0
    %312 = vmatprep.subr.bf16.mxu0 0
    %313 = vmatpush1.bf16.msra.mxu0 0
    %314 = vmatprep.subr.bf16.mxu0 0
    %315 = vmatpush1.bf16.msra.mxu0 0
    %316 = vmatprep.subr.bf16.mxu0 0
    %317 = vmatpush1.bf16.msra.mxu0 0
    %318 = vmatprep.subr.bf16.mxu0 0
    %319 = vmatpush1.bf16.msra.mxu0 0
    %320 = vmatprep.subr.bf16.mxu0 0
    %321 = vmatpush1.bf16.msra.mxu0 0
    %322 = vmatprep.subr.bf16.mxu0 0
    %323 = vmatpush1.bf16.msra.mxu0 0
    %324 = vmatprep.subr.bf16.mxu0 0
    %325 = vmatpush1.bf16.msra.mxu0 0
    %326 = vmatprep.subr.bf16.mxu0 0
    %327 = vmatpush1.bf16.msra.mxu0 0
    %328 = vmatprep.subr.bf16.mxu0 0
    %329 = vmatpush1.bf16.msra.mxu0 0
    %330 = vmatprep.subr.bf16.mxu0 0
    %331 = vmatpush1.bf16.msra.mxu0 0
    %332 = vmatprep.subr.bf16.mxu0 0
    %333 = vmatpush1.bf16.msra.mxu0 0
    %334 = vmatprep.subr.bf16.mxu0 0
    %335 = vmatpush1.bf16.msra.mxu0 0
    %336 = vmatprep.subr.bf16.mxu0 0
    %337 = vmatpush1.bf16.msra.mxu0 0
    %338 = vmatprep.subr.bf16.mxu0 0
    %339 = vmatpush1.bf16.msra.mxu0 0
    %340 = vmatprep.mubr.bf16.mxu0 0
    %341 = vmatmul.mubr.bf16.gmra.mrb[0].mxu0 %v299
    %v342 = vpop.f32.mrb[0].mxu0
    %v343 = vadd.f32 0.0, %v342
    %v344 = vpop.f32.mrb[0].mxu0
    %v345 = vpop.f32.mrb[0].mxu0
    %v346 = vpop.f32.mrb[0].mxu0
    %347 = vdwg.mxu0
    %v350 = vunpack.c.l.b16 %v288
    %v351 = vunpack.c.l.b16 %v289
    %v352 = vpack.c.b16 %v351, %v350
    %v354 = vsel %vm297, %v285, 0
    %v357 = vand.u32 %v352, %v304
    %359 = vmatprep.subr.bf16.mxu0 0
    %360 = vmatpush1.bf16.msra.mxu0 %v357
    %361 = vmatprep.subr.bf16.mxu0 0
    %362 = vmatpush1.bf16.msra.mxu0 0
    %363 = vmatprep.subr.bf16.mxu0 0
    %364 = vmatpush1.bf16.msra.mxu0 0
    %365 = vmatprep.subr.bf16.mxu0 0
    %366 = vmatpush1.bf16.msra.mxu0 0
    %367 = vmatprep.subr.bf16.mxu0 0
    %368 = vmatpush1.bf16.msra.mxu0 0
    %369 = vmatprep.subr.bf16.mxu0 0
    %370 = vmatpush1.bf16.msra.mxu0 0
    %371 = vmatprep.subr.bf16.mxu0 0
    %372 = vmatpush1.bf16.msra.mxu0 0
    %373 = vmatprep.subr.bf16.mxu0 0
    %374 = vmatpush1.bf16.msra.mxu0 0
    %375 = vmatprep.subr.bf16.mxu0 0
    %376 = vmatpush1.bf16.msra.mxu0 0
    %377 = vmatprep.subr.bf16.mxu0 0
    %378 = vmatpush1.bf16.msra.mxu0 0
    %379 = vmatprep.subr.bf16.mxu0 0
    %380 = vmatpush1.bf16.msra.mxu0 0
    %381 = vmatprep.subr.bf16.mxu0 0
    %382 = vmatpush1.bf16.msra.mxu0 0
    %383 = vmatprep.subr.bf16.mxu0 0
    %384 = vmatpush1.bf16.msra.mxu0 0
    %385 = vmatprep.subr.bf16.mxu0 0
    %386 = vmatpush1.bf16.msra.mxu0 0
    %387 = vmatprep.subr.bf16.mxu0 0
    %388 = vmatpush1.bf16.msra.mxu0 0
    %389 = vmatprep.subr.bf16.mxu0 0
    %390 = vmatpush1.bf16.msra.mxu0 0
    %391 = vmatprep.mubr.bf16.mxu0 0
    %392 = vmatmul.mubr.bf16.gmra.mrb[0].mxu0 %v354
    %v393 = vpop.f32.mrb[0].mxu0
    %v394 = vadd.f32 %v343, %v393
    %v395 = vpop.f32.mrb[0].mxu0
    %v396 = vpop.f32.mrb[0].mxu0
    %v397 = vpop.f32.mrb[0].mxu0
    %398 = vdwg.mxu0
    %v399 = vld [vmem:[#allocation10] sm:$0x1]
    %v401 = vlaneseq
    %v402 = vshrl.u32 %v401, 7
    %v403 = vsub.s32 0, %v402
    %v404 = vrot.slane %v399, %v403
    %v406 = vadd.f32 %v394, %v404
    %vm407 = vcmp.gt.f32.partialorder %v406, 0.0
    %v408 = vmul.f32 %v406, 0.01
    %v409 = vsel %vm407, %v406, %v408
    %v410 = vpack.c.bf16 %v409, %v409
    %v411 = vld [vmem:[#allocation11] sm:$0xf]
    %v412 = vld [vmem:[#allocation11 + $0x4] sm:$0xf]
    %v413 = vld [vmem:[#allocation11 + $0x8] sm:$0xf]
    %v414 = vld [vmem:[#allocation11 + $0xc] sm:$0xf]
    %v415 = vld [vmem:[#allocation11 + $0x10] sm:$0xf]
    %v416 = vld [vmem:[#allocation11 + $0x14] sm:$0xf]
    %v417 = vld [vmem:[#allocation11 + $0x18] sm:$0xf]
    %v418 = vld [vmem:[#allocation11 + $0x1c] sm:$0xf]
    %v419 = vld [vmem:[#allocation11 + $0x20] sm:$0xf]
    %v420 = vld [vmem:[#allocation11 + $0x24] sm:$0xf]
    %v421 = vld [vmem:[#allocation11 + $0x28] sm:$0xf]
    %v422 = vld [vmem:[#allocation11 + $0x2c] sm:$0xf]
    %v423 = vld [vmem:[#allocation11 + $0x30] sm:$0xf]
    %v424 = vld [vmem:[#allocation11 + $0x34] sm:$0xf]
    %v425 = vld [vmem:[#allocation11 + $0x38] sm:$0xf]
    %v426 = vld [vmem:[#allocation11 + $0x3c] sm:$0xf]
    %v427 = vld [vmem:[#allocation13] sm:$0x1]
    %v429 = vlaneseq
    %v430 = vshrl.u32 %v429, 7
    %v431 = vsub.s32 0, %v430
    %v432 = vrot.slane %v427, %v431
    %v450 = vunpack.c.l.b16 %v411
    %v451 = vunpack.c.l.b16 %v412
    %v452 = vunpack.c.l.b16 %v413
    %v453 = vunpack.c.l.b16 %v414
    %v454 = vunpack.c.l.b16 %v415
    %v455 = vunpack.c.l.b16 %v416
    %v456 = vunpack.c.l.b16 %v417
    %v457 = vunpack.c.l.b16 %v418
    %v458 = vunpack.c.l.b16 %v419
    %v459 = vunpack.c.l.b16 %v420
    %v460 = vunpack.c.l.b16 %v421
    %v461 = vunpack.c.l.b16 %v422
    %v462 = vunpack.c.l.b16 %v423
    %v463 = vunpack.c.l.b16 %v424
    %v464 = vunpack.c.l.b16 %v425
    %v465 = vunpack.c.l.b16 %v426
    %v466 = vpack.c.b16 %v451, %v450
    %v467 = vpack.c.b16 %v453, %v452
    %v468 = vpack.c.b16 %v455, %v454
    %v469 = vpack.c.b16 %v457, %v456
    %v470 = vpack.c.b16 %v459, %v458
    %v471 = vpack.c.b16 %v461, %v460
    %v472 = vpack.c.b16 %v463, %v462
    %v473 = vpack.c.b16 %v465, %v464
    %482 = vmatprep.subr.bf16.mxu0 0
    %483 = vmatpush1.bf16.msra.mxu0 %v466
    %484 = vmatprep.subr.bf16.mxu0 0
    %485 = vmatpush1.bf16.msra.mxu0 %v467
    %486 = vmatprep.subr.bf16.mxu0 0
    %487 = vmatpush1.bf16.msra.mxu0 %v468
    %488 = vmatprep.subr.bf16.mxu0 0
    %489 = vmatpush1.bf16.msra.mxu0 %v469
    %490 = vmatprep.subr.bf16.mxu0 0
    %491 = vmatpush1.bf16.msra.mxu0 %v470
    %492 = vmatprep.subr.bf16.mxu0 0
    %493 = vmatpush1.bf16.msra.mxu0 %v471
    %494 = vmatprep.subr.bf16.mxu0 0
    %495 = vmatpush1.bf16.msra.mxu0 %v472
    %496 = vmatprep.subr.bf16.mxu0 0
    %497 = vmatpush1.bf16.msra.mxu0 %v473
    %498 = vmatprep.subr.bf16.mxu0 0
    %499 = vmatpush1.bf16.msra.mxu0 0
    %500 = vmatprep.subr.bf16.mxu0 0
    %501 = vmatpush1.bf16.msra.mxu0 0
    %502 = vmatprep.subr.bf16.mxu0 0
    %503 = vmatpush1.bf16.msra.mxu0 0
    %504 = vmatprep.subr.bf16.mxu0 0
    %505 = vmatpush1.bf16.msra.mxu0 0
    %506 = vmatprep.subr.bf16.mxu0 0
    %507 = vmatpush1.bf16.msra.mxu0 0
    %508 = vmatprep.subr.bf16.mxu0 0
    %509 = vmatpush1.bf16.msra.mxu0 0
    %510 = vmatprep.subr.bf16.mxu0 0
    %511 = vmatpush1.bf16.msra.mxu0 0
    %512 = vmatprep.subr.bf16.mxu0 0
    %513 = vmatpush1.bf16.msra.mxu0 0
    %514 = vmatprep.mubr.bf16.mxu0 0
    %515 = vmatmul.mubr.bf16.gmra.mrb[0].mxu0 %v410
    %v516 = vpop.f32.mrb[0].mxu0
    %v517 = vadd.f32 %v432, %v516
    %v518 = vpop.f32.mrb[0].mxu0
    %v519 = vpop.f32.mrb[0].mxu0
    %v520 = vpop.f32.mrb[0].mxu0
    %521 = vdwg.mxu0
    %vm522 = vcmp.gt.f32.partialorder %v517, 0.0
    %v523 = vmul.f32 %v517, 0.01
    %v524 = vsel %vm522, %v517, %v523
    %v525 = vpack.c.bf16 %v524, %v524
    %v526 = vld [vmem:[#allocation14] sm:$0xf]
    %v527 = vld [vmem:[#allocation14 + $0x4] sm:$0xf]
    %v528 = vld [vmem:[#allocation14 + $0x8] sm:$0xf]
    %v529 = vld [vmem:[#allocation14 + $0xc] sm:$0xf]
    %v530 = vld [vmem:[#allocation14 + $0x10] sm:$0xf]
    %v531 = vld [vmem:[#allocation14 + $0x14] sm:$0xf]
    %v532 = vld [vmem:[#allocation14 + $0x18] sm:$0xf]
    %v533 = vld [vmem:[#allocation14 + $0x1c] sm:$0xf]
    %v534 = vld [vmem:[#allocation14 + $0x20] sm:$0xf]
    %v535 = vld [vmem:[#allocation14 + $0x24] sm:$0xf]
    %v536 = vld [vmem:[#allocation14 + $0x28] sm:$0xf]
    %v537 = vld [vmem:[#allocation14 + $0x2c] sm:$0xf]
    %v538 = vld [vmem:[#allocation14 + $0x30] sm:$0xf]
    %v539 = vld [vmem:[#allocation14 + $0x34] sm:$0xf]
    %v540 = vld [vmem:[#allocation14 + $0x38] sm:$0xf]
    %v541 = vld [vmem:[#allocation14 + $0x3c] sm:$0xf]
    %v542 = vld [vmem:[#allocation16] sm:$0x1]
    %v544 = vlaneseq
    %v545 = vshrl.u32 %v544, 7
    %v546 = vsub.s32 0, %v545
    %v547 = vrot.slane %v542, %v546
    %v565 = vunpack.c.l.b16 %v526
    %v566 = vunpack.c.l.b16 %v527
    %v567 = vunpack.c.l.b16 %v528
    %v568 = vunpack.c.l.b16 %v529
    %v569 = vunpack.c.l.b16 %v530
    %v570 = vunpack.c.l.b16 %v531
    %v571 = vunpack.c.l.b16 %v532
    %v572 = vunpack.c.l.b16 %v533
    %v573 = vunpack.c.l.b16 %v534
    %v574 = vunpack.c.l.b16 %v535
    %v575 = vunpack.c.l.b16 %v536
    %v576 = vunpack.c.l.b16 %v537
    %v577 = vunpack.c.l.b16 %v538
    %v578 = vunpack.c.l.b16 %v539
    %v579 = vunpack.c.l.b16 %v540
    %v580 = vunpack.c.l.b16 %v541
    %v581 = vpack.c.b16 %v566, %v565
    %v582 = vpack.c.b16 %v568, %v567
    %v583 = vpack.c.b16 %v570, %v569
    %v584 = vpack.c.b16 %v572, %v571
    %v585 = vpack.c.b16 %v574, %v573
    %v586 = vpack.c.b16 %v576, %v575
    %v587 = vpack.c.b16 %v578, %v577
    %v588 = vpack.c.b16 %v580, %v579
    %597 = vmatprep.subr.bf16.mxu0 0
    %598 = vmatpush1.bf16.msra.mxu0 %v581
    %599 = vmatprep.subr.bf16.mxu0 0
    %600 = vmatpush1.bf16.msra.mxu0 %v582
    %601 = vmatprep.subr.bf16.mxu0 0
    %602 = vmatpush1.bf16.msra.mxu0 %v583
    %603 = vmatprep.subr.bf16.mxu0 0
    %604 = vmatpush1.bf16.msra.mxu0 %v584
    %605 = vmatprep.subr.bf16.mxu0 0
    %606 = vmatpush1.bf16.msra.mxu0 %v585
    %607 = vmatprep.subr.bf16.mxu0 0
    %608 = vmatpush1.bf16.msra.mxu0 %v586
    %609 = vmatprep.subr.bf16.mxu0 0
    %610 = vmatpush1.bf16.msra.mxu0 %v587
    %611 = vmatprep.subr.bf16.mxu0 0
    %612 = vmatpush1.bf16.msra.mxu0 %v588
    %613 = vmatprep.subr.bf16.mxu0 0
    %614 = vmatpush1.bf16.msra.mxu0 0
    %615 = vmatprep.subr.bf16.mxu0 0
    %616 = vmatpush1.bf16.msra.mxu0 0
    %617 = vmatprep.subr.bf16.mxu0 0
    %618 = vmatpush1.bf16.msra.mxu0 0
    %619 = vmatprep.subr.bf16.mxu0 0
    %620 = vmatpush1.bf16.msra.mxu0 0
    %621 = vmatprep.subr.bf16.mxu0 0
    %622 = vmatpush1.bf16.msra.mxu0 0
    %623 = vmatprep.subr.bf16.mxu0 0
    %624 = vmatpush1.bf16.msra.mxu0 0
    %625 = vmatprep.subr.bf16.mxu0 0
    %626 = vmatpush1.bf16.msra.mxu0 0
    %627 = vmatprep.subr.bf16.mxu0 0
    %628 = vmatpush1.bf16.msra.mxu0 0
    %629 = vmatprep.mubr.bf16.mxu0 0
    %630 = vmatmul.mubr.bf16.gmra.mrb[0].mxu0 %v525
    %v631 = vpop.f32.mrb[0].mxu0
    %v632 = vadd.f32 %v547, %v631
    %v633 = vpop.f32.mrb[0].mxu0
    %v634 = vpop.f32.mrb[0].mxu0
    %v635 = vpop.f32.mrb[0].mxu0
    %636 = vdwg.mxu0
    %vm637 = vcmp.gt.f32.partialorder %v632, 0.0
    %v638 = vmul.f32 %v632, 0.01
    %v639 = vsel %vm637, %v632, %v638
    %v640 = vpack.c.bf16 %v639, %v639
    %v641 = vld [vmem:[#allocation17] sm:$0xf]
    %v642 = vld [vmem:[#allocation17 + $0x4] sm:$0xf]
    %v643 = vld [vmem:[#allocation17 + $0x8] sm:$0xf]
    %v644 = vld [vmem:[#allocation17 + $0xc] sm:$0xf]
    %v645 = vld [vmem:[#allocation17 + $0x10] sm:$0xf]
    %v646 = vld [vmem:[#allocation17 + $0x14] sm:$0xf]
    %v647 = vld [vmem:[#allocation17 + $0x18] sm:$0xf]
    %v648 = vld [vmem:[#allocation17 + $0x1c] sm:$0xf]
    %v649 = vld [vmem:[#allocation17 + $0x20] sm:$0xf]
    %v650 = vld [vmem:[#allocation17 + $0x24] sm:$0xf]
    %v651 = vld [vmem:[#allocation17 + $0x28] sm:$0xf]
    %v652 = vld [vmem:[#allocation17 + $0x2c] sm:$0xf]
    %v653 = vld [vmem:[#allocation17 + $0x30] sm:$0xf]
    %v654 = vld [vmem:[#allocation17 + $0x34] sm:$0xf]
    %v655 = vld [vmem:[#allocation17 + $0x38] sm:$0xf]
    %v656 = vld [vmem:[#allocation17 + $0x3c] sm:$0xf]
    %v657 = vld [vmem:[#allocation19] sm:$0x1]
    %v659 = vlaneseq
    %v660 = vshrl.u32 %v659, 7
    %v661 = vsub.s32 0, %v660
    %v662 = vrot.slane %v657, %v661
    %v680 = vunpack.c.l.b16 %v641
    %v681 = vunpack.c.l.b16 %v642
    %v682 = vunpack.c.l.b16 %v643
    %v683 = vunpack.c.l.b16 %v644
    %v684 = vunpack.c.l.b16 %v645
    %v685 = vunpack.c.l.b16 %v646
    %v686 = vunpack.c.l.b16 %v647
    %v687 = vunpack.c.l.b16 %v648
    %v688 = vunpack.c.l.b16 %v649
    %v689 = vunpack.c.l.b16 %v650
    %v690 = vunpack.c.l.b16 %v651
    %v691 = vunpack.c.l.b16 %v652
    %v692 = vunpack.c.l.b16 %v653
    %v693 = vunpack.c.l.b16 %v654
    %v694 = vunpack.c.l.b16 %v655
    %v695 = vunpack.c.l.b16 %v656
    %v696 = vpack.c.b16 %v681, %v680
    %v697 = vpack.c.b16 %v683, %v682
    %v698 = vpack.c.b16 %v685, %v684
    %v699 = vpack.c.b16 %v687, %v686
    %v700 = vpack.c.b16 %v689, %v688
    %v701 = vpack.c.b16 %v691, %v690
    %v702 = vpack.c.b16 %v693, %v692
    %v703 = vpack.c.b16 %v695, %v694
    %712 = vmatprep.subr.bf16.mxu0 0
    %713 = vmatpush1.bf16.msra.mxu0 %v696
    %714 = vmatprep.subr.bf16.mxu0 0
    %715 = vmatpush1.bf16.msra.mxu0 %v697
    %716 = vmatprep.subr.bf16.mxu0 0
    %717 = vmatpush1.bf16.msra.mxu0 %v698
    %718 = vmatprep.subr.bf16.mxu0 0
    %719 = vmatpush1.bf16.msra.mxu0 %v699
    %720 = vmatprep.subr.bf16.mxu0 0
    %721 = vmatpush1.bf16.msra.mxu0 %v700
    %722 = vmatprep.subr.bf16.mxu0 0
    %723 = vmatpush1.bf16.msra.mxu0 %v701
    %724 = vmatprep.subr.bf16.mxu0 0
    %725 = vmatpush1.bf16.msra.mxu0 %v702
    %726 = vmatprep.subr.bf16.mxu0 0
    %727 = vmatpush1.bf16.msra.mxu0 %v703
    %728 = vmatprep.subr.bf16.mxu0 0
    %729 = vmatpush1.bf16.msra.mxu0 0
    %730 = vmatprep.subr.bf16.mxu0 0
    %731 = vmatpush1.bf16.msra.mxu0 0
    %732 = vmatprep.subr.bf16.mxu0 0
    %733 = vmatpush1.bf16.msra.mxu0 0
    %734 = vmatprep.subr.bf16.mxu0 0
    %735 = vmatpush1.bf16.msra.mxu0 0
    %736 = vmatprep.subr.bf16.mxu0 0
    %737 = vmatpush1.bf16.msra.mxu0 0
    %738 = vmatprep.subr.bf16.mxu0 0
    %739 = vmatpush1.bf16.msra.mxu0 0
    %740 = vmatprep.subr.bf16.mxu0 0
    %741 = vmatpush1.bf16.msra.mxu0 0
    %742 = vmatprep.subr.bf16.mxu0 0
    %743 = vmatpush1.bf16.msra.mxu0 0
    %744 = vmatprep.mubr.bf16.mxu0 0
    %745 = vmatmul.mubr.bf16.gmra.mrb[0].mxu0 %v640
    %v746 = vpop.f32.mrb[0].mxu0
    %v747 = vadd.f32 %v662, %v746
    %v748 = vpop.f32.mrb[0].mxu0
    %v749 = vpop.f32.mrb[0].mxu0
    %v750 = vpop.f32.mrb[0].mxu0
    %751 = vdwg.mxu0
    %vm752 = vcmp.gt.f32.partialorder %v747, 0.0
    %v753 = vmul.f32 %v747, 0.01
    %v754 = vsel %vm752, %v747, %v753
    %v755 = vpack.c.bf16 %v754, %v754
    %v756 = vld [vmem:[#allocation20] sm:$0xf]
    %v757 = vld [vmem:[#allocation20 + $0x4] sm:$0xf]
    %v758 = vld [vmem:[#allocation20 + $0x8] sm:$0xf]
    %v759 = vld [vmem:[#allocation20 + $0xc] sm:$0xf]
    %v760 = vld [vmem:[#allocation20 + $0x10] sm:$0xf]
    %v761 = vld [vmem:[#allocation20 + $0x14] sm:$0xf]
    %v762 = vld [vmem:[#allocation20 + $0x18] sm:$0xf]
    %v763 = vld [vmem:[#allocation20 + $0x1c] sm:$0xf]
    %v764 = vld [vmem:[#allocation20 + $0x20] sm:$0xf]
    %v765 = vld [vmem:[#allocation20 + $0x24] sm:$0xf]
    %v766 = vld [vmem:[#allocation20 + $0x28] sm:$0xf]
    %v767 = vld [vmem:[#allocation20 + $0x2c] sm:$0xf]
    %v768 = vld [vmem:[#allocation20 + $0x30] sm:$0xf]
    %v769 = vld [vmem:[#allocation20 + $0x34] sm:$0xf]
    %v770 = vld [vmem:[#allocation20 + $0x38] sm:$0xf]
    %v771 = vld [vmem:[#allocation20 + $0x3c] sm:$0xf]
    %v772 = vld [vmem:[#allocation22] sm:$0x1]
    %v774 = vlaneseq
    %v775 = vshrl.u32 %v774, 7
    %v776 = vsub.s32 0, %v775
    %v777 = vrot.slane %v772, %v776
    %v795 = vunpack.c.l.b16 %v756
    %v796 = vunpack.c.l.b16 %v757
    %v797 = vunpack.c.l.b16 %v758
    %v798 = vunpack.c.l.b16 %v759
    %v799 = vunpack.c.l.b16 %v760
    %v800 = vunpack.c.l.b16 %v761
    %v801 = vunpack.c.l.b16 %v762
    %v802 = vunpack.c.l.b16 %v763
    %v803 = vunpack.c.l.b16 %v764
    %v804 = vunpack.c.l.b16 %v765
    %v805 = vunpack.c.l.b16 %v766
    %v806 = vunpack.c.l.b16 %v767
    %v807 = vunpack.c.l.b16 %v768
    %v808 = vunpack.c.l.b16 %v769
    %v809 = vunpack.c.l.b16 %v770
    %v810 = vunpack.c.l.b16 %v771
    %v811 = vpack.c.b16 %v796, %v795
    %v812 = vpack.c.b16 %v798, %v797
    %v813 = vpack.c.b16 %v800, %v799
    %v814 = vpack.c.b16 %v802, %v801
    %v815 = vpack.c.b16 %v804, %v803
    %v816 = vpack.c.b16 %v806, %v805
    %v817 = vpack.c.b16 %v808, %v807
    %v818 = vpack.c.b16 %v810, %v809
    %827 = vmatprep.subr.bf16.mxu0 0
    %828 = vmatpush1.bf16.msra.mxu0 %v811
    %829 = vmatprep.subr.bf16.mxu0 0
    %830 = vmatpush1.bf16.msra.mxu0 %v812
    %831 = vmatprep.subr.bf16.mxu0 0
    %832 = vmatpush1.bf16.msra.mxu0 %v813
    %833 = vmatprep.subr.bf16.mxu0 0
    %834 = vmatpush1.bf16.msra.mxu0 %v814
    %835 = vmatprep.subr.bf16.mxu0 0
    %836 = vmatpush1.bf16.msra.mxu0 %v815
    %837 = vmatprep.subr.bf16.mxu0 0
    %838 = vmatpush1.bf16.msra.mxu0 %v816
    %839 = vmatprep.subr.bf16.mxu0 0
    %840 = vmatpush1.bf16.msra.mxu0 %v817
    %841 = vmatprep.subr.bf16.mxu0 0
    %842 = vmatpush1.bf16.msra.mxu0 %v818
    %843 = vmatprep.subr.bf16.mxu0 0
    %844 = vmatpush1.bf16.msra.mxu0 0
    %845 = vmatprep.subr.bf16.mxu0 0
    %846 = vmatpush1.bf16.msra.mxu0 0
    %847 = vmatprep.subr.bf16.mxu0 0
    %848 = vmatpush1.bf16.msra.mxu0 0
    %849 = vmatprep.subr.bf16.mxu0 0
    %850 = vmatpush1.bf16.msra.mxu0 0
    %851 = vmatprep.subr.bf16.mxu0 0
    %852 = vmatpush1.bf16.msra.mxu0 0
    %853 = vmatprep.subr.bf16.mxu0 0
    %854 = vmatpush1.bf16.msra.mxu0 0
    %855 = vmatprep.subr.bf16.mxu0 0
    %856 = vmatpush1.bf16.msra.mxu0 0
    %857 = vmatprep.subr.bf16.mxu0 0
    %858 = vmatpush1.bf16.msra.mxu0 0
    %859 = vmatprep.mubr.bf16.mxu0 0
    %860 = vmatmul.mubr.bf16.gmra.mrb[0].mxu0 %v755
    %v861 = vpop.f32.mrb[0].mxu0
    %v862 = vadd.f32 %v777, %v861
    %v863 = vpop.f32.mrb[0].mxu0
    %v864 = vpop.f32.mrb[0].mxu0
    %v865 = vpop.f32.mrb[0].mxu0
    %866 = vdwg.mxu0
    %vm867 = vcmp.gt.f32.partialorder %v862, 0.0
    %v868 = vmul.f32 %v862, 0.01
    %v869 = vsel %vm867, %v862, %v868
    %v870 = vpack.c.bf16 %v869, %v869
    %v871 = vld [vmem:[#allocation23] sm:$0xf]
    %v872 = vld [vmem:[#allocation23 + $0x4] sm:$0xf]
    %v873 = vld [vmem:[#allocation23 + $0x8] sm:$0xf]
    %v874 = vld [vmem:[#allocation23 + $0xc] sm:$0xf]
    %v875 = vld [vmem:[#allocation23 + $0x10] sm:$0xf]
    %v876 = vld [vmem:[#allocation23 + $0x14] sm:$0xf]
    %v877 = vld [vmem:[#allocation23 + $0x18] sm:$0xf]
    %v878 = vld [vmem:[#allocation23 + $0x1c] sm:$0xf]
    %v879 = vld [vmem:[#allocation23 + $0x20] sm:$0xf]
    %v880 = vld [vmem:[#allocation23 + $0x24] sm:$0xf]
    %v881 = vld [vmem:[#allocation23 + $0x28] sm:$0xf]
    %v882 = vld [vmem:[#allocation23 + $0x2c] sm:$0xf]
    %v883 = vld [vmem:[#allocation23 + $0x30] sm:$0xf]
    %v884 = vld [vmem:[#allocation23 + $0x34] sm:$0xf]
    %v885 = vld [vmem:[#allocation23 + $0x38] sm:$0xf]
    %v886 = vld [vmem:[#allocation23 + $0x3c] sm:$0xf]
    %v887 = vld [vmem:[#allocation25] sm:$0x1]
    %v889 = vlaneseq
    %v890 = vshrl.u32 %v889, 7
    %v891 = vsub.s32 0, %v890
    %v892 = vrot.slane %v887, %v891
    %v910 = vunpack.c.l.b16 %v871
    %v911 = vunpack.c.l.b16 %v872
    %v912 = vunpack.c.l.b16 %v873
    %v913 = vunpack.c.l.b16 %v874
    %v914 = vunpack.c.l.b16 %v875
    %v915 = vunpack.c.l.b16 %v876
    %v916 = vunpack.c.l.b16 %v877
    %v917 = vunpack.c.l.b16 %v878
    %v918 = vunpack.c.l.b16 %v879
    %v919 = vunpack.c.l.b16 %v880
    %v920 = vunpack.c.l.b16 %v881
    %v921 = vunpack.c.l.b16 %v882
    %v922 = vunpack.c.l.b16 %v883
    %v923 = vunpack.c.l.b16 %v884
    %v924 = vunpack.c.l.b16 %v885
    %v925 = vunpack.c.l.b16 %v886
    %v926 = vpack.c.b16 %v911, %v910
    %v927 = vpack.c.b16 %v913, %v912
    %v928 = vpack.c.b16 %v915, %v914
    %v929 = vpack.c.b16 %v917, %v916
    %v930 = vpack.c.b16 %v919, %v918
    %v931 = vpack.c.b16 %v921, %v920
    %v932 = vpack.c.b16 %v923, %v922
    %v933 = vpack.c.b16 %v925, %v924
    %942 = vmatprep.subr.bf16.mxu0 0
    %943 = vmatpush1.bf16.msra.mxu0 %v926
    %944 = vmatprep.subr.bf16.mxu0 0
    %945 = vmatpush1.bf16.msra.mxu0 %v927
    %946 = vmatprep.subr.bf16.mxu0 0
    %947 = vmatpush1.bf16.msra.mxu0 %v928
    %948 = vmatprep.subr.bf16.mxu0 0
    %949 = vmatpush1.bf16.msra.mxu0 %v929
    %950 = vmatprep.subr.bf16.mxu0 0
    %951 = vmatpush1.bf16.msra.mxu0 %v930
    %952 = vmatprep.subr.bf16.mxu0 0
    %953 = vmatpush1.bf16.msra.mxu0 %v931
    %954 = vmatprep.subr.bf16.mxu0 0
    %955 = vmatpush1.bf16.msra.mxu0 %v932
    %956 = vmatprep.subr.bf16.mxu0 0
    %957 = vmatpush1.bf16.msra.mxu0 %v933
    %958 = vmatprep.subr.bf16.mxu0 0
    %959 = vmatpush1.bf16.msra.mxu0 0
    %960 = vmatprep.subr.bf16.mxu0 0
    %961 = vmatpush1.bf16.msra.mxu0 0
    %962 = vmatprep.subr.bf16.mxu0 0
    %963 = vmatpush1.bf16.msra.mxu0 0
    %964 = vmatprep.subr.bf16.mxu0 0
    %965 = vmatpush1.bf16.msra.mxu0 0
    %966 = vmatprep.subr.bf16.mxu0 0
    %967 = vmatpush1.bf16.msra.mxu0 0
    %968 = vmatprep.subr.bf16.mxu0 0
    %969 = vmatpush1.bf16.msra.mxu0 0
    %970 = vmatprep.subr.bf16.mxu0 0
    %971 = vmatpush1.bf16.msra.mxu0 0
    %972 = vmatprep.subr.bf16.mxu0 0
    %973 = vmatpush1.bf16.msra.mxu0 0
    %974 = vmatprep.mubr.bf16.mxu0 0
    %975 = vmatmul.mubr.bf16.gmra.mrb[0].mxu0 %v870
    %v976 = vpop.f32.mrb[0].mxu0
    %v977 = vadd.f32 %v892, %v976
    %v978 = vpop.f32.mrb[0].mxu0
    %v979 = vpop.f32.mrb[0].mxu0
    %v980 = vpop.f32.mrb[0].mxu0
    %981 = vdwg.mxu0
    %v982 = vmax.f32 %v977, 0.0
    %v983 = vand.u32 2147483647, %v977
    %v984 = vsub.f32 0.0, %v983
    %v985 = vmul.f32 %v984, 1.442695
    %v986 = vpow.pop %v985
    %v987 = vadd.f32 %v986, 1.0
    %v988 = vlog2.pop %v987
    %v989 = vmul.f32 %v988, 0.6931472
    %v990 = vmul.f32 -0.5, %v986
    %v991 = vadd.f32 %v990, 1.0
    %v992 = vmul.f32 %v991, %v986
    %v993 = vand.u32 2147483647, %v986
    %vm994 = vcmp.lt.f32.partialorder %v993, 0.0004427343
    %v995 = vsel %vm994, %v992, %v989
    %v996 = vadd.f32 %v982, %v995
    %997 = vst [vmem:[#allocation29] sm:$0xff] %v996
    %v998 = vld [vmem:[#allocation26] sm:$0xf]
    %v999 = vld [vmem:[#allocation26 + $0x4] sm:$0xf]
    %v1000 = vld [vmem:[#allocation26 + $0x8] sm:$0xf]
    %v1001 = vld [vmem:[#allocation26 + $0xc] sm:$0xf]
    %v1002 = vld [vmem:[#allocation26 + $0x10] sm:$0xf]
    %v1003 = vld [vmem:[#allocation26 + $0x14] sm:$0xf]
    %v1004 = vld [vmem:[#allocation26 + $0x18] sm:$0xf]
    %v1005 = vld [vmem:[#allocation26 + $0x1c] sm:$0xf]
    %v1006 = vld [vmem:[#allocation26 + $0x20] sm:$0xf]
    %v1007 = vld [vmem:[#allocation26 + $0x24] sm:$0xf]
    %v1008 = vld [vmem:[#allocation26 + $0x28] sm:$0xf]
    %v1009 = vld [vmem:[#allocation26 + $0x2c] sm:$0xf]
    %v1010 = vld [vmem:[#allocation26 + $0x30] sm:$0xf]
    %v1011 = vld [vmem:[#allocation26 + $0x34] sm:$0xf]
    %v1012 = vld [vmem:[#allocation26 + $0x38] sm:$0xf]
    %v1013 = vld [vmem:[#allocation26 + $0x3c] sm:$0xf]
    %v1014 = vld [vmem:[#allocation28] sm:$0x1]
    %v1016 = vlaneseq
    %v1017 = vshrl.u32 %v1016, 7
    %v1018 = vsub.s32 0, %v1017
    %v1019 = vrot.slane %v1014, %v1018
    %v1037 = vunpack.c.l.b16 %v998
    %v1038 = vunpack.c.l.b16 %v999
    %v1039 = vunpack.c.l.b16 %v1000
    %v1040 = vunpack.c.l.b16 %v1001
    %v1041 = vunpack.c.l.b16 %v1002
    %v1042 = vunpack.c.l.b16 %v1003
    %v1043 = vunpack.c.l.b16 %v1004
    %v1044 = vunpack.c.l.b16 %v1005
    %v1045 = vunpack.c.l.b16 %v1006
    %v1046 = vunpack.c.l.b16 %v1007
    %v1047 = vunpack.c.l.b16 %v1008
    %v1048 = vunpack.c.l.b16 %v1009
    %v1049 = vunpack.c.l.b16 %v1010
    %v1050 = vunpack.c.l.b16 %v1011
    %v1051 = vunpack.c.l.b16 %v1012
    %v1052 = vunpack.c.l.b16 %v1013
    %v1053 = vpack.c.b16 %v1038, %v1037
    %v1054 = vpack.c.b16 %v1040, %v1039
    %v1055 = vpack.c.b16 %v1042, %v1041
    %v1056 = vpack.c.b16 %v1044, %v1043
    %v1057 = vpack.c.b16 %v1046, %v1045
    %v1058 = vpack.c.b16 %v1048, %v1047
    %v1059 = vpack.c.b16 %v1050, %v1049
    %v1060 = vpack.c.b16 %v1052, %v1051
    %1069 = vmatprep.subr.bf16.mxu0 0
    %1070 = vmatpush1.bf16.msra.mxu0 %v1053
    %1071 = vmatprep.subr.bf16.mxu0 0
    %1072 = vmatpush1.bf16.msra.mxu0 %v1054
    %1073 = vmatprep.subr.bf16.mxu0 0
    %1074 = vmatpush1.bf16.msra.mxu0 %v1055
    %1075 = vmatprep.subr.bf16.mxu0 0
    %1076 = vmatpush1.bf16.msra.mxu0 %v1056
    %1077 = vmatprep.subr.bf16.mxu0 0
    %1078 = vmatpush1.bf16.msra.mxu0 %v1057
    %1079 = vmatprep.subr.bf16.mxu0 0
    %1080 = vmatpush1.bf16.msra.mxu0 %v1058
    %1081 = vmatprep.subr.bf16.mxu0 0
    %1082 = vmatpush1.bf16.msra.mxu0 %v1059
    %1083 = vmatprep.subr.bf16.mxu0 0
    %1084 = vmatpush1.bf16.msra.mxu0 %v1060
    %1085 = vmatprep.subr.bf16.mxu0 0
    %1086 = vmatpush1.bf16.msra.mxu0 0
    %1087 = vmatprep.subr.bf16.mxu0 0
    %1088 = vmatpush1.bf16.msra.mxu0 0
    %1089 = vmatprep.subr.bf16.mxu0 0
    %1090 = vmatpush1.bf16.msra.mxu0 0
    %1091 = vmatprep.subr.bf16.mxu0 0
    %1092 = vmatpush1.bf16.msra.mxu0 0
    %1093 = vmatprep.subr.bf16.mxu0 0
    %1094 = vmatpush1.bf16.msra.mxu0 0
    %1095 = vmatprep.subr.bf16.mxu0 0
    %1096 = vmatpush1.bf16.msra.mxu0 0
    %1097 = vmatprep.subr.bf16.mxu0 0
    %1098 = vmatpush1.bf16.msra.mxu0 0
    %1099 = vmatprep.subr.bf16.mxu0 0
    %1100 = vmatpush1.bf16.msra.mxu0 0
    %1101 = vmatprep.mubr.bf16.mxu0 0
    %1102 = vmatmul.mubr.bf16.gmra.mrb[0].mxu0 %v870
    %v1103 = vpop.f32.mrb[0].mxu0
    %v1104 = vadd.f32 %v1019, %v1103
    %v1105 = vpop.f32.mrb[0].mxu0
    %v1106 = vpop.f32.mrb[0].mxu0
    %v1107 = vpop.f32.mrb[0].mxu0
    %1108 = vdwg.mxu0
    %v1109 = vsub.f32 0.0, %v1104
    %v1110 = vmul.f32 %v1109, 1.442695
    %v1111 = vpow.pop %v1110
    %v1112 = vadd.f32 %v1111, 1.0
    %v1113 = vrcp.pop %v1112
    %1114 = vst [vmem:[#allocation30] sm:$0xff] %v1113
    %v1115 = vld [vmem:[%s17] sm:$0xf]
    %v1116 = vld [vmem:[%s17 + $0x4] sm:$0xf]
    %v1117 = vld [vmem:[%s17 + $0x8] sm:$0xf]
    %v1118 = vld [vmem:[%s17 + $0xc] sm:$0xf]
    %v1119 = vld [vmem:[%s17 + $0x10] sm:$0xf]
    %v1120 = vld [vmem:[%s17 + $0x14] sm:$0xf]
    %v1121 = vld [vmem:[%s17 + $0x18] sm:$0xf]
    %v1122 = vld [vmem:[%s17 + $0x1c] sm:$0xf]
    %v1123 = vld [vmem:[%s17 + $0x20] sm:$0xf]
    %v1124 = vld [vmem:[%s17 + $0x24] sm:$0xf]
    %v1125 = vld [vmem:[%s17 + $0x28] sm:$0xf]
    %v1126 = vld [vmem:[%s17 + $0x2c] sm:$0xf]
    %v1127 = vld [vmem:[%s17 + $0x30] sm:$0xf]
    %v1128 = vld [vmem:[%s17 + $0x34] sm:$0xf]
    %v1129 = vld [vmem:[%s17 + $0x38] sm:$0xf]
    %v1130 = vld [vmem:[%s17 + $0x3c] sm:$0xf]
    %v1131 = vld [vmem:[%s18] sm:$0x1]
    %v1133 = vlaneseq
    %v1134 = vshrl.u32 %v1133, 7
    %v1135 = vsub.s32 0, %v1134
    %v1136 = vrot.slane %v1131, %v1135
    %v1154 = vunpack.c.l.b16 %v1115
    %v1155 = vunpack.c.l.b16 %v1116
    %v1156 = vunpack.c.l.b16 %v1117
    %v1157 = vunpack.c.l.b16 %v1118
    %v1158 = vunpack.c.l.b16 %v1119
    %v1159 = vunpack.c.l.b16 %v1120
    %v1160 = vunpack.c.l.b16 %v1121
    %v1161 = vunpack.c.l.b16 %v1122
    %v1162 = vunpack.c.l.b16 %v1123
    %v1163 = vunpack.c.l.b16 %v1124
    %v1164 = vunpack.c.l.b16 %v1125
    %v1165 = vunpack.c.l.b16 %v1126
    %v1166 = vunpack.c.l.b16 %v1127
    %v1167 = vunpack.c.l.b16 %v1128
    %v1168 = vunpack.c.l.b16 %v1129
    %v1169 = vunpack.c.l.b16 %v1130
    %v1170 = vpack.c.b16 %v1155, %v1154
    %v1171 = vpack.c.b16 %v1157, %v1156
    %v1172 = vpack.c.b16 %v1159, %v1158
    %v1173 = vpack.c.b16 %v1161, %v1160
    %v1174 = vpack.c.b16 %v1163, %v1162
    %v1175 = vpack.c.b16 %v1165, %v1164
    %v1176 = vpack.c.b16 %v1167, %v1166
    %v1177 = vpack.c.b16 %v1169, %v1168
    %1186 = vmatprep.subr.bf16.mxu0 0
    %1187 = vmatpush1.bf16.msra.mxu0 %v1170
    %1188 = vmatprep.subr.bf16.mxu0 0
    %1189 = vmatpush1.bf16.msra.mxu0 %v1171
    %1190 = vmatprep.subr.bf16.mxu0 0
    %1191 = vmatpush1.bf16.msra.mxu0 %v1172
    %1192 = vmatprep.subr.bf16.mxu0 0
    %1193 = vmatpush1.bf16.msra.mxu0 %v1173
    %1194 = vmatprep.subr.bf16.mxu0 0
    %1195 = vmatpush1.bf16.msra.mxu0 %v1174
    %1196 = vmatprep.subr.bf16.mxu0 0
    %1197 = vmatpush1.bf16.msra.mxu0 %v1175
    %1198 = vmatprep.subr.bf16.mxu0 0
    %1199 = vmatpush1.bf16.msra.mxu0 %v1176
    %1200 = vmatprep.subr.bf16.mxu0 0
    %1201 = vmatpush1.bf16.msra.mxu0 %v1177
    %1202 = vmatprep.subr.bf16.mxu0 0
    %1203 = vmatpush1.bf16.msra.mxu0 0
    %1204 = vmatprep.subr.bf16.mxu0 0
    %1205 = vmatpush1.bf16.msra.mxu0 0
    %1206 = vmatprep.subr.bf16.mxu0 0
    %1207 = vmatpush1.bf16.msra.mxu0 0
    %1208 = vmatprep.subr.bf16.mxu0 0
    %1209 = vmatpush1.bf16.msra.mxu0 0
    %1210 = vmatprep.subr.bf16.mxu0 0
    %1211 = vmatpush1.bf16.msra.mxu0 0
    %1212 = vmatprep.subr.bf16.mxu0 0
    %1213 = vmatpush1.bf16.msra.mxu0 0
    %1214 = vmatprep.subr.bf16.mxu0 0
    %1215 = vmatpush1.bf16.msra.mxu0 0
    %1216 = vmatprep.subr.bf16.mxu0 0
    %1217 = vmatpush1.bf16.msra.mxu0 0
    %1218 = vmatprep.mubr.bf16.mxu0 0
    %1219 = vmatmul.mubr.bf16.gmra.mrb[0].mxu0 %v870
    %v1220 = vpop.f32.mrb[0].mxu0
    %v1221 = vadd.f32 %v1136, %v1220
    %v1222 = vpop.f32.mrb[0].mxu0
    %v1223 = vpop.f32.mrb[0].mxu0
    %v1224 = vpop.f32.mrb[0].mxu0
    %1225 = vdwg.mxu0
    %v1226 = vmax.f32 %v1221, 0.0
    %v1227 = vand.u32 2147483647, %v1221
    %v1228 = vsub.f32 0.0, %v1227
    %v1229 = vmul.f32 %v1228, 1.442695
    %v1230 = vpow.pop %v1229
    %v1231 = vadd.f32 %v1230, 1.0
    %v1232 = vlog2.pop %v1231
    %v1233 = vmul.f32 %v1232, 0.6931472
    %v1234 = vmul.f32 -0.5, %v1230
    %v1235 = vadd.f32 %v1234, 1.0
    %v1236 = vmul.f32 %v1235, %v1230
    %v1237 = vand.u32 2147483647, %v1230
    %vm1238 = vcmp.lt.f32.partialorder %v1237, 0.0004427343
    %v1239 = vsel %vm1238, %v1236, %v1233
    %v1240 = vadd.f32 %v1226, %v1239
    %1241 = vst [vmem:[#allocation32] sm:$0xff] %v1240
    // Predicated region
    $region146: #{tpu_custom_call.1} parent=1 // pred_check
      _
    $region147: #{tpu_custom_call.1} parent=1 // pred_check_branch
      %1243 = sbr.rel (0) target = $region149
    $region148: #{tpu_custom_call.1} parent=1 // pred_region
      %s1245 = ssub.s32 128, 32
      %1246 = vsyncadd [#allocation4], %s1245
      %s1247 = sshll.u32 [#allocation29], 4
      %s1248 = int_to_ptr.vmem [resolvable:$true] %s1247
      %1253 = dma.vmem_to_hbm [thread:$0]  %s1248, 32, %s19, [#allocation4], 32, 32, 2
    $region149: #{tpu_custom_call.1} parent=1 // pred_fallthru
      _
    // Predicated region
    $region150: #{tpu_custom_call.1} parent=1 // pred_check
      _
    $region151: #{tpu_custom_call.1} parent=1 // pred_check_branch
      %1255 = sbr.rel (0) target = $region153
    $region152: #{tpu_custom_call.1} parent=1 // pred_region
      %s1257 = ssub.s32 128, 32
      %1258 = vsyncadd [#allocation31], %s1257
      %s1259 = sshll.u32 [#allocation30], 4
      %s1260 = int_to_ptr.vmem [resolvable:$true] %s1259
      %1265 = dma.vmem_to_hbm [thread:$0]  %s1260, 32, %s20, [#allocation31], 32, 32, 2
    $region153: #{tpu_custom_call.1} parent=1 // pred_fallthru
      _
    // Predicated region
    $region154: #{tpu_custom_call.1} parent=1 // pred_check
      _
    $region155: #{tpu_custom_call.1} parent=1 // pred_check_branch
      %1267 = sbr.rel (0) target = $region157
    $region156: #{tpu_custom_call.1} parent=1 // pred_region
      %s1269 = ssub.s32 128, 32
      %1270 = vsyncadd [#allocation31], %s1269
      %s1271 = sshll.u32 [#allocation32], 4
      %s1272 = int_to_ptr.vmem [resolvable:$true] %s1271
      %1277 = dma.vmem_to_hbm [thread:$0]  %s1272, 32, %s21, [#allocation31], 32, 32, 2
    $region157: #{tpu_custom_call.1} parent=1 // pred_fallthru
      _
    // Predicated region
    $region158: #{tpu_custom_call.1} parent=1 // pred_check
      _
    $region159: #{tpu_custom_call.1} parent=1 // pred_check_branch
      %1279 = sbr.rel (0) target = $region161
    $region160: #{tpu_custom_call.1} parent=1 // pred_region
      %1280 = dma.done [#allocation4], 128
    $region161: #{tpu_custom_call.1} parent=1 // pred_fallthru
      _
    // Predicated region
    $region162: #{tpu_custom_call.1} parent=1 // pred_check
      _
    $region163: #{tpu_custom_call.1} parent=1 // pred_check_branch
      %1282 = sbr.rel (0) target = $region165
    $region164: #{tpu_custom_call.1} parent=1 // pred_region
      %1283 = dma.done [#allocation31], 128
    $region165: #{tpu_custom_call.1} parent=1 // pred_fallthru
      _
    // Predicated region
    $region166: #{tpu_custom_call.1} parent=1 // pred_check
      _
    $region167: #{tpu_custom_call.1} parent=1 // pred_check_branch
      %1285 = sbr.rel (0) target = $region169
    $region168: #{tpu_custom_call.1} parent=1 // pred_region
      %1286 = dma.done [#allocation31], 128
    $region169: #{tpu_custom_call.1} parent=1 // pred_fallthru
      _
    %1287 = vsyncpa [#allocation3], 1
    %1288 = vsyncpa [#allocation6], 1
    %1289 = vsyncpa [#allocation9], 1
    %1290 = vsyncpa [#allocation12], 1
    %1291 = vsyncpa [#allocation15], 1
    %1292 = vsyncpa [#allocation18], 1
    %1293 = vsyncpa [#allocation21], 1
    %1294 = vsyncpa [#allocation24], 1
    %1295 = vsyncpa [#allocation27], 1
    %1296 = vsyncpa [#allocation4], 1
    %1297 = vsyncpa [#allocation31], 1

</llo_original>
